<compile_context>
chip_gen: v7x
topology: tpu7x:2x2x1
jax: 0.10.0
libtpu: 0.0.40
codegen_flags: <defaults>
</compile_context>

<pallas_src>
import jax
import jax.numpy as jnp
from jax import lax
from jax.experimental import pallas as pl
from jax.experimental.pallas import tpu as pltpu

_LANE = 128
_DEFAULT_SCOPED_VMEM = 32 * 1024 * 1024   # default scoped VMEM on v5e/v6e/v7x
_V7X_PHYS_VMEM = 64 * 1024 * 1024


def _round_up(v, m):
    return ((v + m - 1) // m) * m


# ----------------------- fused encoder + decoder kernel ----------------------
# Small/medium N: everything (adj, adj_pred, intermediates) resident in VMEM.
# adj / x arrive in f32 and are cast to bf16 in-register (MXU-native), all
# accumulation stays f32 via preferred_element_type.
def _fused_kernel(x_ref, adj_ref, w1_ref, w2_ref, adj_pred_ref, z_ref):
    adj = adj_ref[...].astype(jnp.bfloat16)                          # (N, N)

    # gc1: hidden1 = relu(adj @ (x @ W1))   (dropout = identity in eval)
    xw = jnp.dot(x_ref[...].astype(jnp.bfloat16), w1_ref[...],
                 preferred_element_type=jnp.float32)                 # (N, H1p)
    hidden1 = jnp.maximum(
        jnp.dot(adj, xw.astype(jnp.bfloat16),
                preferred_element_type=jnp.float32),
        0.0,
    ).astype(jnp.bfloat16)                                           # (N, H1p)

    # gc2: mu = adj @ (hidden1 @ W2); eval-mode reparameterize -> z = mu
    hw = jnp.dot(hidden1, w2_ref[...],
                 preferred_element_type=jnp.float32)                 # (N, H2p)
    z = jnp.dot(adj, hw.astype(jnp.bfloat16),
                preferred_element_type=jnp.float32)                  # (N, H2p) f32

    # Narrow f32 z for the caller (padded columns are exactly zero).
    z_ref[...] = z[:, : z_ref.shape[1]]

    # Fused InnerProductDecoder: adj_pred = z @ z.T  (z still VMEM-resident).
    zb = z.astype(jnp.bfloat16)
    adj_pred_ref[...] = lax.dot_general(
        zb, zb, (((1,), (1,)), ((), ())),
        preferred_element_type=jnp.float32,
    ).astype(adj_pred_ref.dtype)
    # TODO(synk): training path would need the gc3/logvar branch plus in-kernel
    # PRNG (pltpu.prng_random_bits) for eps*exp(logvar)+mu; eval semantics only.


# ----------------------- split path: encoder kernel ---------------------------
# Emits (a) narrow f32 z for the caller and (b) bf16 lane-padded z for the
# tiled decoder, so the wrapper never re-touches z.
def _encoder_kernel(x_ref, adj_ref, w1_ref, w2_ref, z_ref, zbf_ref):
    adj = adj_ref[...].astype(jnp.bfloat16)
    xw = jnp.dot(x_ref[...].astype(jnp.bfloat16), w1_ref[...],
                 preferred_element_type=jnp.float32)
    hidden1 = jnp.maximum(
        jnp.dot(adj, xw.astype(jnp.bfloat16),
                preferred_element_type=jnp.float32),
        0.0,
    ).astype(jnp.bfloat16)
    hw = jnp.dot(hidden1, w2_ref[...], preferred_element_type=jnp.float32)
    z = jnp.dot(adj, hw.astype(jnp.bfloat16),
                preferred_element_type=jnp.float32)
    z_ref[...] = z[:, : z_ref.shape[1]]
    zbf_ref[...] = z.astype(jnp.bfloat16)
    # TODO(synk): for very large N (v7x: adj bf16 alone is 32 MiB at N=4096,
    # physical VMEM is 64 MiB) this should become a row-tiled, grid=(N/tm,)
    # "parallel" encoder so both v7x TensorCores are used and VMEM stays bounded.


# ----------------------- split path: tiled decoder ---------------------------
# adj_pred[i*tm:(i+1)*tm, j*tn:(j+1)*tn] = z_i @ z_j.T
def _decoder_kernel(zr_ref, zc_ref, out_ref):
    out_ref[...] = lax.dot_general(
        zr_ref[...], zc_ref[...],
        (((1,), (1,)), ((), ())),
        preferred_element_type=jnp.float32,
    ).astype(out_ref.dtype)


def _largest_tile(n_pad, desired):
    """Largest multiple of 128 that divides n_pad and is <= desired."""
    best = _LANE
    cap = min(desired, n_pad)
    t = _LANE
    while t <= cap:
        if n_pad % t == 0:
            best = t
        t += _LANE
    return best


def _decoder(z_bf, *, tm=256, tn=512, out_dtype=jnp.bfloat16):
    n_pad, h2p = z_bf.shape
    tm = _largest_tile(n_pad, tm)
    tn = _largest_tile(n_pad, tn)
    grid = (n_pad // tm, n_pad // tn)
    return pl.pallas_call(
        _decoder_kernel,
        out_shape=jax.ShapeDtypeStruct((n_pad, n_pad), out_dtype),
        grid=grid,
        in_specs=[
            pl.BlockSpec((tm, h2p), lambda i, j: (i, 0)),
            pl.BlockSpec((tn, h2p), lambda i, j: (j, 0)),
        ],
        out_specs=pl.BlockSpec((tm, tn), lambda i, j: (i, j)),
        compiler_params=pltpu.CompilerParams(
            dimension_semantics=("parallel", "parallel")),
    )(z_bf, z_bf)


# ------------------------------ wrapper --------------------------------------
def _fused_vmem_estimate(n, f, h1p, h2p, adj_pred_dtype):
    adj_bytes = 4 * n * n + 2 * n * n                     # f32 input + bf16 copy
    out_bytes = n * n * jnp.dtype(adj_pred_dtype).itemsize
    x_bytes = 6 * n * f
    interm = n * (6 * h1p + 10 * h2p)                     # xw/hidden1/hw/z/zb
    weights = 2 * (f * h1p + h1p * h2p)
    return adj_bytes + out_bytes + x_bytes + interm + weights


def gcn_model_vaecd_forward(x, adj, w1, w2, w3=None, *,
                            adj_pred_dtype=jnp.bfloat16,
                            decoder_tm=256, decoder_tn=512,
                            fuse_decoder=None):
    """Eval-mode forward() of GCNModelVAECD: returns (dc(z), z) with z = mu.

    w3 (the gc3 / logvar weights) is accepted for interface parity but unused:
    in eval mode reparameterize returns mu and forward() discards logvar.
    adj_pred is returned in bf16 by default (halves N^2 HBM writeback); pass
    adj_pred_dtype=jnp.float32 for exact PyTorch-dtype parity.
    """
    del w3
    n, f = x.shape
    h1, h2 = w1.shape[1], w2.shape[1]
    h1p = _round_up(h1, _LANE)
    h2p = _round_up(h2, _LANE)

    # Tiny weights: zero-pad output dims to lane width + cast once (negligible).
    w1p = jnp.pad(w1, ((0, 0), (0, h1p - h1))).astype(jnp.bfloat16)          # (F, H1p)
    w2p = jnp.pad(w2, ((0, h1p - h1), (0, h2p - h2))).astype(jnp.bfloat16)   # (H1p, H2p)

    vmem = pl.BlockSpec(memory_space=pltpu.MemorySpace.VMEM)

    fused_bytes = _fused_vmem_estimate(n, f, h1p, h2p, adj_pred_dtype)
    if fuse_decoder is None:
        # Fuse whenever the whole problem comfortably fits the default scoped
        # VMEM on every generation (v7x included).
        fuse_decoder = fused_bytes <= 24 * 1024 * 1024

    if fuse_decoder:
        adj_pred, z = pl.pallas_call(
            _fused_kernel,
            out_shape=(jax.ShapeDtypeStruct((n, n), adj_pred_dtype),
                       jax.ShapeDtypeStruct((n, h2), jnp.float32)),
            in_specs=[vmem, vmem, vmem, vmem],
            out_specs=(vmem, vmem),
        )(x, adj, w1p, w2p)
        return adj_pred, z

    # ---- large-N split path: encoder call + tiled decoder call ----
    enc_bytes = (6 * n * n + 6 * n * f + n * (6 * h1p + 10 * h2p)
                 + 2 * (f * h1p + h1p * h2p))
    compiler_params = None
    if enc_bytes > _DEFAULT_SCOPED_VMEM:
        compiler_params = pltpu.CompilerParams(
            vmem_limit_bytes=min(int(enc_bytes * 1.3), _V7X_PHYS_VMEM))

    z, z_bf = pl.pallas_call(
        _encoder_kernel,
        out_shape=(jax.ShapeDtypeStruct((n, h2), jnp.float32),
                   jax.ShapeDtypeStruct((n, h2p), jnp.bfloat16)),
        in_specs=[vmem, vmem, vmem, vmem],
        out_specs=(vmem, vmem),
        compiler_params=compiler_params,
    )(x, adj, w1p, w2p)

    # Pad z rows only to the 128-sublane multiple (never to the tile size).
    n_pad = _round_up(n, _LANE)
    z_dec = z_bf if n_pad == n else jnp.pad(z_bf, ((0, n_pad - n), (0, 0)))
    adj_pred = _decoder(z_dec, tm=decoder_tm, tn=decoder_tn,
                        out_dtype=adj_pred_dtype)
    return adj_pred[:n, :n], z


if __name__ == "__main__":
    key = jax.random.PRNGKey(0)
    N, F_DIM, H1, H2, N_CLUSTERS = 256, 32, 32, 16, 4
    ks = jax.random.split(key, 7)

    # Node features
    x = jax.random.normal(ks[0], (N, F_DIM), jnp.float32)

    # Dense symmetric normalized adjacency (stand-in for the sparse adj input)
    a = (jax.random.uniform(ks[1], (N, N)) < 0.05).astype(jnp.float32)
    adj_raw = jnp.minimum(a + a.T, 1.0) + jnp.eye(N, dtype=jnp.float32)
    d_inv_sqrt = 1.0 / jnp.sqrt(jnp.sum(adj_raw, axis=1))
    adj = adj_raw * d_inv_sqrt[:, None] * d_inv_sqrt[None, :]

    # Glorot-style deterministic weights for gc1/gc2/gc3
    w1 = jax.random.normal(ks[2], (F_DIM, H1), jnp.float32) / jnp.sqrt(F_DIM)
    w2 = jax.random.normal(ks[3], (H1, H2), jnp.float32) / jnp.sqrt(H1)
    w3 = jax.random.normal(ks[4], (H1, H2), jnp.float32) / jnp.sqrt(H1)  # unused in eval forward

    # Cluster parameters exist in __init__ but are not used by forward().
    pi_ = jnp.full((N_CLUSTERS,), 1.0 / N_CLUSTERS, jnp.float32)
    mu_c = jax.random.normal(ks[5], (N_CLUSTERS, H2), jnp.float32)
    log_sigma2_c = jax.random.normal(ks[6], (N_CLUSTERS, H2), jnp.float32)

    # Pure-JAX f32 reference of the eval-mode forward.
    hidden1_ref = jnp.maximum(adj @ (x @ w1), 0.0)
    mu_ref = adj @ (hidden1_ref @ w2)
    adj_pred_ref = mu_ref @ mu_ref.T

    def check(adj_pred, z):
        assert adj_pred.shape == (N, N)
        assert z.shape == (N, H2) and z.dtype == jnp.float32
        z_err = jnp.linalg.norm(z - mu_ref) / (jnp.linalg.norm(mu_ref) + 1e-12)
        a_err = (jnp.linalg.norm(adj_pred.astype(jnp.float32) - adj_pred_ref)
                 / (jnp.linalg.norm(adj_pred_ref) + 1e-12))
        assert float(z_err) < 5e-2, f"z relative error too large: {float(z_err)}"
        assert float(a_err) < 5e-2, f"adj_pred relative error too large: {float(a_err)}"

    # Primary (fused) path — what the demo size actually uses.
    adj_pred, z = gcn_model_vaecd_forward(x, adj, w1, w2, w3)
    jax.block_until_ready((adj_pred, z))
    check(adj_pred, z)

    # Also exercise the large-N split path once (encoder + tiled decoder).
    adj_pred2, z2 = gcn_model_vaecd_forward(x, adj, w1, w2, w3,
                                            fuse_decoder=False)
    jax.block_until_ready((adj_pred2, z2))
    check(adj_pred2, z2)

    print("KERNEL_OK")
</pallas_src>

<mosaic_0001>
module attributes {stable_mosaic.version = 11 : i64} {
  func.func @_fused_kernel(%arg0: memref<256x32xf32, #tpu.memory_space<vmem>>, %arg1: memref<256x256xf32, #tpu.memory_space<vmem>>, %arg2: memref<32x128xbf16, #tpu.memory_space<vmem>>, %arg3: memref<128x128xbf16, #tpu.memory_space<vmem>>, %arg4: memref<256x256xbf16, #tpu.memory_space<vmem>>, %arg5: memref<256x16xf32, #tpu.memory_space<vmem>>) attributes {dimension_semantics = [], scalar_prefetch = 0 : i64, scratch_operands = 0 : i64, tpu.core_type = #tpu.core_type<tc>} {
    %c0 = arith.constant 0 : index
    %c0_0 = arith.constant 0 : index
    %0 = vector.load %arg1[%c0, %c0_0] : memref<256x256xf32, #tpu.memory_space<vmem>>, vector<256x256xf32>
    %1 = arith.truncf %0 : vector<256x256xf32> to vector<256x256xbf16>
    %c0_1 = arith.constant 0 : index
    %c0_2 = arith.constant 0 : index
    %2 = vector.load %arg0[%c0_1, %c0_2] : memref<256x32xf32, #tpu.memory_space<vmem>>, vector<256x32xf32>
    %3 = arith.truncf %2 : vector<256x32xf32> to vector<256x32xbf16>
    %c0_3 = arith.constant 0 : index
    %c0_4 = arith.constant 0 : index
    %4 = vector.load %arg2[%c0_3, %c0_4] : memref<32x128xbf16, #tpu.memory_space<vmem>>, vector<32x128xbf16>
    %cst = arith.constant dense<0.000000e+00> : vector<256x128xf32>
    %5 = tpu.matmul %3, %4, %cst {dimension_numbers = #tpu.dot_dimension_numbers<[1], [0], [0], [1], [0, 0, 1, 1], [], []>} : vector<256x32xbf16>, vector<32x128xbf16>, vector<256x128xf32> -> vector<256x128xf32>
    %6 = arith.truncf %5 : vector<256x128xf32> to vector<256x128xbf16>
    %cst_5 = arith.constant dense<0.000000e+00> : vector<256x128xf32>
    %7 = tpu.matmul %1, %6, %cst_5 {dimension_numbers = #tpu.dot_dimension_numbers<[1], [0], [0], [1], [0, 0, 1, 1], [], []>} : vector<256x256xbf16>, vector<256x128xbf16>, vector<256x128xf32> -> vector<256x128xf32>
    %cst_6 = arith.constant 0.000000e+00 : f32
    %8 = vector.broadcast %cst_6 : f32 to vector<256x128xf32>
    %9 = arith.maximumf %7, %8 : vector<256x128xf32>
    %10 = arith.truncf %9 : vector<256x128xf32> to vector<256x128xbf16>
    %c0_7 = arith.constant 0 : index
    %c0_8 = arith.constant 0 : index
    %11 = vector.load %arg3[%c0_7, %c0_8] : memref<128x128xbf16, #tpu.memory_space<vmem>>, vector<128x128xbf16>
    %cst_9 = arith.constant dense<0.000000e+00> : vector<256x128xf32>
    %12 = tpu.matmul %10, %11, %cst_9 {dimension_numbers = #tpu.dot_dimension_numbers<[1], [0], [0], [1], [0, 0, 1, 1], [], []>} : vector<256x128xbf16>, vector<128x128xbf16>, vector<256x128xf32> -> vector<256x128xf32>
    %13 = arith.truncf %12 : vector<256x128xf32> to vector<256x128xbf16>
    %cst_10 = arith.constant dense<0.000000e+00> : vector<256x128xf32>
    %14 = tpu.matmul %1, %13, %cst_10 {dimension_numbers = #tpu.dot_dimension_numbers<[1], [0], [0], [1], [0, 0, 1, 1], [], []>} : vector<256x256xbf16>, vector<256x128xbf16>, vector<256x128xf32> -> vector<256x128xf32>
    %15 = vector.extract_strided_slice %14 {offsets = [0, 0], sizes = [256, 16], strides = [1, 1]} : vector<256x128xf32> to vector<256x16xf32>
    %c0_11 = arith.constant 0 : index
    %c0_12 = arith.constant 0 : index
    %16 = vector.load %arg5[%c0_11, %c0_12] : memref<256x16xf32, #tpu.memory_space<vmem>>, vector<256x16xf32>
    tpu.vector_store %arg5[%c0_11, %c0_12], %15 {strides = array<i32>} : memref<256x16xf32, #tpu.memory_space<vmem>>, vector<256x16xf32>,
    %17 = arith.truncf %14 : vector<256x128xf32> to vector<256x128xbf16>
    %cst_13 = arith.constant dense<0.000000e+00> : vector<256x256xf32>
    %18 = tpu.matmul %17, %17, %cst_13 {dimension_numbers = #tpu.dot_dimension_numbers<[1], [1], [0], [0], [0, 0, 1, 0], [], []>} : vector<256x128xbf16>, vector<256x128xbf16>, vector<256x256xf32> -> vector<256x256xf32>
    %19 = arith.truncf %18 : vector<256x256xf32> to vector<256x256xbf16>
    %c0_14 = arith.constant 0 : index
    %c0_15 = arith.constant 0 : index
    %20 = vector.load %arg4[%c0_14, %c0_15] : memref<256x256xbf16, #tpu.memory_space<vmem>>, vector<256x256xbf16>
    tpu.vector_store %arg4[%c0_14, %c0_15], %19 {strides = array<i32>} : memref<256x256xbf16, #tpu.memory_space<vmem>>, vector<256x256xbf16>,
    return
  }
}

</mosaic_0001>

<llo_original>
// kernel: tpu_custom_call.1
$region0: #{tpu_custom_call.1}
  #allocation0 [shape = 'u32[]', space=smem, size = 0x4, offset = 0x4, fixed_abs, tag = 'smem constant byte address 0x4 - core index']
  #allocation1 [shape = 'u32[144,128]{1,0:T(1,128)}', space=vmem, size = 0x12000, scoped, tag = 'internal scratch']
  %s0 = inlined_call_operand.vmem [shape: f32[256,32], index: 0, kind: input, shape index: {}]
  %s1 = inlined_call_operand.hbm [shape: f32[256,256], index: 1, kind: input, shape index: {}]
  %s2 = inlined_call_operand.vmem [shape: bf16[32,128], index: 2, kind: input, shape index: {}]
  %s3 = inlined_call_operand.vmem [shape: bf16[128,128], index: 3, kind: input, shape index: {}]
  %s4 = inlined_call_operand.hbm [shape: bf16[256,256], index: 4, kind: output, shape index: {0}]
  %s5 = inlined_call_operand.vmem [shape: f32[256,16], index: 5, kind: output, shape index: {1}]
  %6 = xla_tuple %s4, %s5
  %s7 = sld [smem:[#allocation0]]
  $region38: #{tpu_custom_call.1} parent=0
    _
  %s9 = ssub.s32 1, %s7
  %s10 = scalar_select 0, %s9, %s7
  $region1: #{tpu_custom_call.1} parent=0
    #allocation2 [shape = 'u8[262144]{0}', space=vmem, size = 0x40000, scoped, tag = 'input window, operand 1, single buffered']
    #allocation3 [shape = 's32[1]{0}', space=sflag, size = 0x4, scoped, tag = 'scoped memory for tpu_custom_call.1']
    #allocation4 [shape = 's32[1]{0}', space=sflag, size = 0x4, scoped, tag = 'scoped memory for tpu_custom_call.1']
    #allocation5 [shape = 'u8[131072]{0}', space=vmem, size = 0x20000, scoped, tag = 'output window, operand 0, single buffered']
    %11 = vsyncpa [#allocation3], 0
    %12 = vsyncpa [#allocation4], 0
    // Predicated region
    $region2: #{tpu_custom_call.1} parent=1 // pred_check
      _
    $region3: #{tpu_custom_call.1} parent=1 // pred_check_branch
      %14 = sbr.rel (0) target = $region5
    $region4: #{tpu_custom_call.1} parent=1 // pred_region
      _
    $region5: #{tpu_custom_call.1} parent=1 // pred_fallthru
      _
    // Predicated region
    $region6: #{tpu_custom_call.1} parent=1 // pred_check
      _
    $region7: #{tpu_custom_call.1} parent=1 // pred_check_branch
      %16 = sbr.rel (0) target = $region9
    $region8: #{tpu_custom_call.1} parent=1 // pred_region
      %s18 = ssub.s32 8192, 8192
      %19 = vsyncadd [#allocation3], %s18
      %s20 = sshll.u32 [#allocation2], 4
      %s21 = int_to_ptr.vmem [resolvable:$true] %s20
      %26 = dma.hbm_to_vmem [thread:$0]  %s1, 8192, %s21, [#allocation3], 256, 256, 16
    $region9: #{tpu_custom_call.1} parent=1 // pred_fallthru
      _
    // Predicated region
    $region10: #{tpu_custom_call.1} parent=1 // pred_check
      _
    $region11: #{tpu_custom_call.1} parent=1 // pred_check_branch
      %28 = sbr.rel (0) target = $region13
    $region12: #{tpu_custom_call.1} parent=1 // pred_region
      _
    $region13: #{tpu_custom_call.1} parent=1 // pred_fallthru
      _
    // Predicated region
    $region14: #{tpu_custom_call.1} parent=1 // pred_check
      _
    $region15: #{tpu_custom_call.1} parent=1 // pred_check_branch
      %30 = sbr.rel (0) target = $region17
    $region16: #{tpu_custom_call.1} parent=1 // pred_region
      _
    $region17: #{tpu_custom_call.1} parent=1 // pred_fallthru
      _
    // Predicated region
    $region18: #{tpu_custom_call.1} parent=1 // pred_check
      _
    $region19: #{tpu_custom_call.1} parent=1 // pred_check_branch
      %32 = sbr.rel (0) target = $region21
    $region20: #{tpu_custom_call.1} parent=1 // pred_region
      %33 = dma.done [#allocation3], 8192
    $region21: #{tpu_custom_call.1} parent=1 // pred_fallthru
      _
    %v35 = vld [vmem:[#allocation2] sm:$0xff]
    %v36 = vld [vmem:[#allocation2 + $0x8] sm:$0xff]
    %v37 = vld [vmem:[#allocation2 + $0x10] sm:$0xff]
    %v38 = vld [vmem:[#allocation2 + $0x18] sm:$0xff]
    %v39 = vld [vmem:[#allocation2 + $0x20] sm:$0xff]
    %v40 = vld [vmem:[#allocation2 + $0x28] sm:$0xff]
    %v41 = vld [vmem:[#allocation2 + $0x30] sm:$0xff]
    %v42 = vld [vmem:[#allocation2 + $0x38] sm:$0xff]
    %v43 = vld [vmem:[#allocation2 + $0x40] sm:$0xff]
    %v44 = vld [vmem:[#allocation2 + $0x48] sm:$0xff]
    %v45 = vld [vmem:[#allocation2 + $0x50] sm:$0xff]
    %v46 = vld [vmem:[#allocation2 + $0x58] sm:$0xff]
    %v47 = vld [vmem:[#allocation2 + $0x60] sm:$0xff]
    %v48 = vld [vmem:[#allocation2 + $0x68] sm:$0xff]
    %v49 = vld [vmem:[#allocation2 + $0x70] sm:$0xff]
    %v50 = vld [vmem:[#allocation2 + $0x78] sm:$0xff]
    %v51 = vld [vmem:[#allocation2 + $0x80] sm:$0xff]
    %v52 = vld [vmem:[#allocation2 + $0x88] sm:$0xff]
    %v53 = vld [vmem:[#allocation2 + $0x90] sm:$0xff]
    %v54 = vld [vmem:[#allocation2 + $0x98] sm:$0xff]
    %v55 = vld [vmem:[#allocation2 + $0xa0] sm:$0xff]
    %v56 = vld [vmem:[#allocation2 + $0xa8] sm:$0xff]
    %v57 = vld [vmem:[#allocation2 + $0xb0] sm:$0xff]
    %v58 = vld [vmem:[#allocation2 + $0xb8] sm:$0xff]
    %v59 = vld [vmem:[#allocation2 + $0xc0] sm:$0xff]
    %v60 = vld [vmem:[#allocation2 + $0xc8] sm:$0xff]
    %v61 = vld [vmem:[#allocation2 + $0xd0] sm:$0xff]
    %v62 = vld [vmem:[#allocation2 + $0xd8] sm:$0xff]
    %v63 = vld [vmem:[#allocation2 + $0xe0] sm:$0xff]
    %v64 = vld [vmem:[#allocation2 + $0xe8] sm:$0xff]
    %v65 = vld [vmem:[#allocation2 + $0xf0] sm:$0xff]
    %v66 = vld [vmem:[#allocation2 + $0xf8] sm:$0xff]
    %v67 = vld [vmem:[#allocation2 + $0x100] sm:$0xff]
    %v68 = vld [vmem:[#allocation2 + $0x108] sm:$0xff]
    %v69 = vld [vmem:[#allocation2 + $0x110] sm:$0xff]
    %v70 = vld [vmem:[#allocation2 + $0x118] sm:$0xff]
    %v71 = vld [vmem:[#allocation2 + $0x120] sm:$0xff]
    %v72 = vld [vmem:[#allocation2 + $0x128] sm:$0xff]
    %v73 = vld [vmem:[#allocation2 + $0x130] sm:$0xff]
    %v74 = vld [vmem:[#allocation2 + $0x138] sm:$0xff]
    %v75 = vld [vmem:[#allocation2 + $0x140] sm:$0xff]
    %v76 = vld [vmem:[#allocation2 + $0x148] sm:$0xff]
    %v77 = vld [vmem:[#allocation2 + $0x150] sm:$0xff]
    %v78 = vld [vmem:[#allocation2 + $0x158] sm:$0xff]
    %v79 = vld [vmem:[#allocation2 + $0x160] sm:$0xff]
    %v80 = vld [vmem:[#allocation2 + $0x168] sm:$0xff]
    %v81 = vld [vmem:[#allocation2 + $0x170] sm:$0xff]
    %v82 = vld [vmem:[#allocation2 + $0x178] sm:$0xff]
    %v83 = vld [vmem:[#allocation2 + $0x180] sm:$0xff]
    %v84 = vld [vmem:[#allocation2 + $0x188] sm:$0xff]
    %v85 = vld [vmem:[#allocation2 + $0x190] sm:$0xff]
    %v86 = vld [vmem:[#allocation2 + $0x198] sm:$0xff]
    %v87 = vld [vmem:[#allocation2 + $0x1a0] sm:$0xff]
    %v88 = vld [vmem:[#allocation2 + $0x1a8] sm:$0xff]
    %v89 = vld [vmem:[#allocation2 + $0x1b0] sm:$0xff]
    %v90 = vld [vmem:[#allocation2 + $0x1b8] sm:$0xff]
    %v91 = vld [vmem:[#allocation2 + $0x1c0] sm:$0xff]
    %v92 = vld [vmem:[#allocation2 + $0x1c8] sm:$0xff]
    %v93 = vld [vmem:[#allocation2 + $0x1d0] sm:$0xff]
    %v94 = vld [vmem:[#allocation2 + $0x1d8] sm:$0xff]
    %v95 = vld [vmem:[#allocation2 + $0x1e0] sm:$0xff]
    %v96 = vld [vmem:[#allocation2 + $0x1e8] sm:$0xff]
    %v97 = vld [vmem:[#allocation2 + $0x1f0] sm:$0xff]
    %v98 = vld [vmem:[#allocation2 + $0x1f8] sm:$0xff]
    %v99 = vpack.c.bf16 %v37, %v35
    %v100 = vpack.c.bf16 %v38, %v36
    %v101 = vpack.c.bf16 %v41, %v39
    %v102 = vpack.c.bf16 %v42, %v40
    %v103 = vpack.c.bf16 %v45, %v43
    %v104 = vpack.c.bf16 %v46, %v44
    %v105 = vpack.c.bf16 %v49, %v47
    %v106 = vpack.c.bf16 %v50, %v48
    %v107 = vpack.c.bf16 %v53, %v51
    %v108 = vpack.c.bf16 %v54, %v52
    %v109 = vpack.c.bf16 %v57, %v55
    %v110 = vpack.c.bf16 %v58, %v56
    %v111 = vpack.c.bf16 %v61, %v59
    %v112 = vpack.c.bf16 %v62, %v60
    %v113 = vpack.c.bf16 %v65, %v63
    %v114 = vpack.c.bf16 %v66, %v64
    %v115 = vpack.c.bf16 %v69, %v67
    %v116 = vpack.c.bf16 %v70, %v68
    %v117 = vpack.c.bf16 %v73, %v71
    %v118 = vpack.c.bf16 %v74, %v72
    %v119 = vpack.c.bf16 %v77, %v75
    %v120 = vpack.c.bf16 %v78, %v76
    %v121 = vpack.c.bf16 %v81, %v79
    %v122 = vpack.c.bf16 %v82, %v80
    %v123 = vpack.c.bf16 %v85, %v83
    %v124 = vpack.c.bf16 %v86, %v84
    %v125 = vpack.c.bf16 %v89, %v87
    %v126 = vpack.c.bf16 %v90, %v88
    %v127 = vpack.c.bf16 %v93, %v91
    %v128 = vpack.c.bf16 %v94, %v92
    %v129 = vpack.c.bf16 %v97, %v95
    %v130 = vpack.c.bf16 %v98, %v96
    %v131 = vld [vmem:[%s0] sm:$0xff]
    %v132 = vld [vmem:[%s0 + $0x8] sm:$0xff]
    %v133 = vld [vmem:[%s0 + $0x10] sm:$0xff]
    %v134 = vld [vmem:[%s0 + $0x18] sm:$0xff]
    %v135 = vld [vmem:[%s0 + $0x20] sm:$0xff]
    %v136 = vld [vmem:[%s0 + $0x28] sm:$0xff]
    %v137 = vld [vmem:[%s0 + $0x30] sm:$0xff]
    %v138 = vld [vmem:[%s0 + $0x38] sm:$0xff]
    %v139 = vld [vmem:[%s0 + $0x40] sm:$0xff]
    %v140 = vld [vmem:[%s0 + $0x48] sm:$0xff]
    %v141 = vld [vmem:[%s0 + $0x50] sm:$0xff]
    %v142 = vld [vmem:[%s0 + $0x58] sm:$0xff]
    %v143 = vld [vmem:[%s0 + $0x60] sm:$0xff]
    %v144 = vld [vmem:[%s0 + $0x68] sm:$0xff]
    %v145 = vld [vmem:[%s0 + $0x70] sm:$0xff]
    %v146 = vld [vmem:[%s0 + $0x78] sm:$0xff]
    %v147 = vld [vmem:[%s0 + $0x80] sm:$0xff]
    %v148 = vld [vmem:[%s0 + $0x88] sm:$0xff]
    %v149 = vld [vmem:[%s0 + $0x90] sm:$0xff]
    %v150 = vld [vmem:[%s0 + $0x98] sm:$0xff]
    %v151 = vld [vmem:[%s0 + $0xa0] sm:$0xff]
    %v152 = vld [vmem:[%s0 + $0xa8] sm:$0xff]
    %v153 = vld [vmem:[%s0 + $0xb0] sm:$0xff]
    %v154 = vld [vmem:[%s0 + $0xb8] sm:$0xff]
    %v155 = vld [vmem:[%s0 + $0xc0] sm:$0xff]
    %v156 = vld [vmem:[%s0 + $0xc8] sm:$0xff]
    %v157 = vld [vmem:[%s0 + $0xd0] sm:$0xff]
    %v158 = vld [vmem:[%s0 + $0xd8] sm:$0xff]
    %v159 = vld [vmem:[%s0 + $0xe0] sm:$0xff]
    %v160 = vld [vmem:[%s0 + $0xe8] sm:$0xff]
    %v161 = vld [vmem:[%s0 + $0xf0] sm:$0xff]
    %v162 = vld [vmem:[%s0 + $0xf8] sm:$0xff]
    %v163 = vpack.c.bf16 %v132, %v131
    %v164 = vpack.c.bf16 %v134, %v133
    %v165 = vpack.c.bf16 %v136, %v135
    %v166 = vpack.c.bf16 %v138, %v137
    %v167 = vpack.c.bf16 %v140, %v139
    %v168 = vpack.c.bf16 %v142, %v141
    %v169 = vpack.c.bf16 %v144, %v143
    %v170 = vpack.c.bf16 %v146, %v145
    %v171 = vpack.c.bf16 %v148, %v147
    %v172 = vpack.c.bf16 %v150, %v149
    %v173 = vpack.c.bf16 %v152, %v151
    %v174 = vpack.c.bf16 %v154, %v153
    %v175 = vpack.c.bf16 %v156, %v155
    %v176 = vpack.c.bf16 %v158, %v157
    %v177 = vpack.c.bf16 %v160, %v159
    %v178 = vpack.c.bf16 %v162, %v161
    %v179 = vld [vmem:[%s2] sm:$0xf]
    %v180 = vld [vmem:[%s2 + $0x4] sm:$0xf]
    %v181 = vld [vmem:[%s2 + $0x8] sm:$0xf]
    %v182 = vld [vmem:[%s2 + $0xc] sm:$0xf]
    %v187 = vunpack.c.l.b16 %v179
    %v188 = vunpack.c.l.b16 %v180
    %v189 = vunpack.c.l.b16 %v181
    %v190 = vunpack.c.l.b16 %v182
    %v191 = vpack.c.b16 %v188, %v187
    %v192 = vpack.c.b16 %v190, %v189
    %vm195 = vcmask 261120
    %v197 = vsel %vm195, %v163, 0
    %v200 = vsel %vm195, %v164, 0
    %v203 = vsel %vm195, %v165, 0
    %v206 = vsel %vm195, %v166, 0
    %v209 = vsel %vm195, %v167, 0
    %v212 = vsel %vm195, %v168, 0
    %v215 = vsel %vm195, %v169, 0
    %v218 = vsel %vm195, %v170, 0
    %v221 = vsel %vm195, %v171, 0
    %v224 = vsel %vm195, %v172, 0
    %v227 = vsel %vm195, %v173, 0
    %v230 = vsel %vm195, %v174, 0
    %v233 = vsel %vm195, %v175, 0
    %v236 = vsel %vm195, %v176, 0
    %v239 = vsel %vm195, %v177, 0
    %v242 = vsel %vm195, %v178, 0
    %244 = vmatprep.subr.bf16.mxu0 0
    %245 = vmatpush1.bf16.msra.mxu0 %v191
    %246 = vmatprep.subr.bf16.mxu0 0
    %247 = vmatpush1.bf16.msra.mxu0 %v192
    %248 = vmatprep.subr.bf16.mxu0 0
    %249 = vmatpush1.bf16.msra.mxu0 0
    %250 = vmatprep.subr.bf16.mxu0 0
    %251 = vmatpush1.bf16.msra.mxu0 0
    %252 = vmatprep.subr.bf16.mxu0 0
    %253 = vmatpush1.bf16.msra.mxu0 0
    %254 = vmatprep.subr.bf16.mxu0 0
    %255 = vmatpush1.bf16.msra.mxu0 0
    %256 = vmatprep.subr.bf16.mxu0 0
    %257 = vmatpush1.bf16.msra.mxu0 0
    %258 = vmatprep.subr.bf16.mxu0 0
    %259 = vmatpush1.bf16.msra.mxu0 0
    %260 = vmatprep.subr.bf16.mxu0 0
    %261 = vmatpush1.bf16.msra.mxu0 0
    %262 = vmatprep.subr.bf16.mxu0 0
    %263 = vmatpush1.bf16.msra.mxu0 0
    %264 = vmatprep.subr.bf16.mxu0 0
    %265 = vmatpush1.bf16.msra.mxu0 0
    %266 = vmatprep.subr.bf16.mxu0 0
    %267 = vmatpush1.bf16.msra.mxu0 0
    %268 = vmatprep.subr.bf16.mxu0 0
    %269 = vmatpush1.bf16.msra.mxu0 0
    %270 = vmatprep.subr.bf16.mxu0 0
    %271 = vmatpush1.bf16.msra.mxu0 0
    %272 = vmatprep.subr.bf16.mxu0 0
    %273 = vmatpush1.bf16.msra.mxu0 0
    %274 = vmatprep.subr.bf16.mxu0 0
    %275 = vmatpush1.bf16.msra.mxu0 0
    %276 = vmatprep.mubr.bf16.mxu0 0
    %277 = vmatmul.mubr.bf16.gmra.mrb[0].mxu0 %v197
    %v278 = vpop.f32.mrb[0].mxu0
    %v279 = vadd.f32 0.0, %v278
    %v280 = vpop.f32.mrb[0].mxu0
    %v281 = vpop.f32.mrb[0].mxu0
    %v282 = vadd.f32 0.0, %v281
    %v283 = vpop.f32.mrb[0].mxu0
    %284 = vmatprep.mubr.bf16.mxu0 0
    %285 = vmatmul.mubr.bf16.gmra.mrb[0].mxu0 %v200
    %v286 = vpop.f32.mrb[0].mxu0
    %v287 = vadd.f32 0.0, %v286
    %v288 = vpop.f32.mrb[0].mxu0
    %v289 = vpop.f32.mrb[0].mxu0
    %v290 = vadd.f32 0.0, %v289
    %v291 = vpop.f32.mrb[0].mxu0
    %292 = vmatprep.mubr.bf16.mxu0 0
    %293 = vmatmul.mubr.bf16.gmra.mrb[0].mxu0 %v203
    %v294 = vpop.f32.mrb[0].mxu0
    %v295 = vadd.f32 0.0, %v294
    %v296 = vpop.f32.mrb[0].mxu0
    %v297 = vpop.f32.mrb[0].mxu0
    %v298 = vadd.f32 0.0, %v297
    %v299 = vpop.f32.mrb[0].mxu0
    %300 = vmatprep.mubr.bf16.mxu0 0
    %301 = vmatmul.mubr.bf16.gmra.mrb[0].mxu0 %v206
    %v302 = vpop.f32.mrb[0].mxu0
    %v303 = vadd.f32 0.0, %v302
    %v304 = vpop.f32.mrb[0].mxu0
    %v305 = vpop.f32.mrb[0].mxu0
    %v306 = vadd.f32 0.0, %v305
    %v307 = vpop.f32.mrb[0].mxu0
    %308 = vmatprep.mubr.bf16.mxu0 0
    %309 = vmatmul.mubr.bf16.gmra.mrb[0].mxu0 %v209
    %v310 = vpop.f32.mrb[0].mxu0
    %v311 = vadd.f32 0.0, %v310
    %v312 = vpop.f32.mrb[0].mxu0
    %v313 = vpop.f32.mrb[0].mxu0
    %v314 = vadd.f32 0.0, %v313
    %v315 = vpop.f32.mrb[0].mxu0
    %316 = vmatprep.mubr.bf16.mxu0 0
    %317 = vmatmul.mubr.bf16.gmra.mrb[0].mxu0 %v212
    %v318 = vpop.f32.mrb[0].mxu0
    %v319 = vadd.f32 0.0, %v318
    %v320 = vpop.f32.mrb[0].mxu0
    %v321 = vpop.f32.mrb[0].mxu0
    %v322 = vadd.f32 0.0, %v321
    %v323 = vpop.f32.mrb[0].mxu0
    %324 = vmatprep.mubr.bf16.mxu0 0
    %325 = vmatmul.mubr.bf16.gmra.mrb[0].mxu0 %v215
    %v326 = vpop.f32.mrb[0].mxu0
    %v327 = vadd.f32 0.0, %v326
    %v328 = vpop.f32.mrb[0].mxu0
    %v329 = vpop.f32.mrb[0].mxu0
    %v330 = vadd.f32 0.0, %v329
    %v331 = vpop.f32.mrb[0].mxu0
    %332 = vmatprep.mubr.bf16.mxu0 0
    %333 = vmatmul.mubr.bf16.gmra.mrb[0].mxu0 %v218
    %v334 = vpop.f32.mrb[0].mxu0
    %v335 = vadd.f32 0.0, %v334
    %v336 = vpop.f32.mrb[0].mxu0
    %v337 = vpop.f32.mrb[0].mxu0
    %v338 = vadd.f32 0.0, %v337
    %v339 = vpop.f32.mrb[0].mxu0
    %340 = vmatprep.mubr.bf16.mxu0 0
    %341 = vmatmul.mubr.bf16.gmra.mrb[0].mxu0 %v221
    %v342 = vpop.f32.mrb[0].mxu0
    %v343 = vadd.f32 0.0, %v342
    %v344 = vpop.f32.mrb[0].mxu0
    %v345 = vpop.f32.mrb[0].mxu0
    %v346 = vadd.f32 0.0, %v345
    %v347 = vpop.f32.mrb[0].mxu0
    %348 = vmatprep.mubr.bf16.mxu0 0
    %349 = vmatmul.mubr.bf16.gmra.mrb[0].mxu0 %v224
    %v350 = vpop.f32.mrb[0].mxu0
    %v351 = vadd.f32 0.0, %v350
    %v352 = vpop.f32.mrb[0].mxu0
    %v353 = vpop.f32.mrb[0].mxu0
    %v354 = vadd.f32 0.0, %v353
    %v355 = vpop.f32.mrb[0].mxu0
    %356 = vmatprep.mubr.bf16.mxu0 0
    %357 = vmatmul.mubr.bf16.gmra.mrb[0].mxu0 %v227
    %v358 = vpop.f32.mrb[0].mxu0
    %v359 = vadd.f32 0.0, %v358
    %v360 = vpop.f32.mrb[0].mxu0
    %v361 = vpop.f32.mrb[0].mxu0
    %v362 = vadd.f32 0.0, %v361
    %v363 = vpop.f32.mrb[0].mxu0
    %364 = vmatprep.mubr.bf16.mxu0 0
    %365 = vmatmul.mubr.bf16.gmra.mrb[0].mxu0 %v230
    %v366 = vpop.f32.mrb[0].mxu0
    %v367 = vadd.f32 0.0, %v366
    %v368 = vpop.f32.mrb[0].mxu0
    %v369 = vpop.f32.mrb[0].mxu0
    %v370 = vadd.f32 0.0, %v369
    %v371 = vpop.f32.mrb[0].mxu0
    %372 = vmatprep.mubr.bf16.mxu0 0
    %373 = vmatmul.mubr.bf16.gmra.mrb[0].mxu0 %v233
    %v374 = vpop.f32.mrb[0].mxu0
    %v375 = vadd.f32 0.0, %v374
    %v376 = vpop.f32.mrb[0].mxu0
    %v377 = vpop.f32.mrb[0].mxu0
    %v378 = vadd.f32 0.0, %v377
    %v379 = vpop.f32.mrb[0].mxu0
    %380 = vmatprep.mubr.bf16.mxu0 0
    %381 = vmatmul.mubr.bf16.gmra.mrb[0].mxu0 %v236
    %v382 = vpop.f32.mrb[0].mxu0
    %v383 = vadd.f32 0.0, %v382
    %v384 = vpop.f32.mrb[0].mxu0
    %v385 = vpop.f32.mrb[0].mxu0
    %v386 = vadd.f32 0.0, %v385
    %v387 = vpop.f32.mrb[0].mxu0
    %388 = vmatprep.mubr.bf16.mxu0 0
    %389 = vmatmul.mubr.bf16.gmra.mrb[0].mxu0 %v239
    %v390 = vpop.f32.mrb[0].mxu0
    %v391 = vadd.f32 0.0, %v390
    %v392 = vpop.f32.mrb[0].mxu0
    %v393 = vpop.f32.mrb[0].mxu0
    %v394 = vadd.f32 0.0, %v393
    %v395 = vpop.f32.mrb[0].mxu0
    %396 = vmatprep.mubr.bf16.mxu0 0
    %397 = vmatmul.mubr.bf16.gmra.mrb[0].mxu0 %v242
    %v398 = vpop.f32.mrb[0].mxu0
    %v399 = vadd.f32 0.0, %v398
    %v400 = vpop.f32.mrb[0].mxu0
    %v401 = vpop.f32.mrb[0].mxu0
    %v402 = vadd.f32 0.0, %v401
    %v403 = vpop.f32.mrb[0].mxu0
    %404 = vdwg.mxu0
    %v405 = vpack.c.bf16 %v282, %v279
    %v406 = vpack.c.bf16 %v290, %v287
    %v407 = vpack.c.bf16 %v298, %v295
    %v408 = vpack.c.bf16 %v306, %v303
    %v409 = vpack.c.bf16 %v314, %v311
    %v410 = vpack.c.bf16 %v322, %v319
    %v411 = vpack.c.bf16 %v330, %v327
    %v412 = vpack.c.bf16 %v338, %v335
    %v413 = vpack.c.bf16 %v346, %v343
    %v414 = vpack.c.bf16 %v354, %v351
    %v415 = vpack.c.bf16 %v362, %v359
    %v416 = vpack.c.bf16 %v370, %v367
    %v417 = vpack.c.bf16 %v378, %v375
    %v418 = vpack.c.bf16 %v386, %v383
    %v419 = vpack.c.bf16 %v394, %v391
    %v420 = vpack.c.bf16 %v402, %v399
    %421 = vmatprep.subr.bf16.mxu0 0
    %422 = vmatpush1.bf16.msra.mxu0 %v405
    %423 = vmatprep.subr.bf16.mxu0 0
    %424 = vmatpush1.bf16.msra.mxu0 %v406
    %425 = vmatprep.subr.bf16.mxu0 0
    %426 = vmatpush1.bf16.msra.mxu0 %v407
    %427 = vmatprep.subr.bf16.mxu0 0
    %428 = vmatpush1.bf16.msra.mxu0 %v408
    %429 = vmatprep.subr.bf16.mxu0 0
    %430 = vmatpush1.bf16.msra.mxu0 %v409
    %431 = vmatprep.subr.bf16.mxu0 0
    %432 = vmatpush1.bf16.msra.mxu0 %v410
    %433 = vmatprep.subr.bf16.mxu0 0
    %434 = vmatpush1.bf16.msra.mxu0 %v411
    %435 = vmatprep.subr.bf16.mxu0 0
    %436 = vmatpush1.bf16.msra.mxu0 %v412
    %437 = vmatprep.subr.bf16.mxu0 0
    %438 = vmatpush1.bf16.msra.mxu0 %v413
    %439 = vmatprep.subr.bf16.mxu0 0
    %440 = vmatpush1.bf16.msra.mxu0 %v414
    %441 = vmatprep.subr.bf16.mxu0 0
    %442 = vmatpush1.bf16.msra.mxu0 %v415
    %443 = vmatprep.subr.bf16.mxu0 0
    %444 = vmatpush1.bf16.msra.mxu0 %v416
    %445 = vmatprep.subr.bf16.mxu0 0
    %446 = vmatpush1.bf16.msra.mxu0 %v417
    %447 = vmatprep.subr.bf16.mxu0 0
    %448 = vmatpush1.bf16.msra.mxu0 %v418
    %449 = vmatprep.subr.bf16.mxu0 0
    %450 = vmatpush1.bf16.msra.mxu0 %v419
    %451 = vmatprep.subr.bf16.mxu0 0
    %452 = vmatpush1.bf16.msra.mxu0 %v420
    %453 = vmatprep.mubr.bf16.mxu0 %v100
    %454 = vmatmul.mubr.bf16.gmra.mrb[0].mxu0 %v99
    %v455 = vpop.f32.mrb[0].mxu0
    %v456 = vadd.f32 0.0, %v455
    %v457 = vpop.f32.mrb[0].mxu0
    %v458 = vpop.f32.mrb[0].mxu0
    %v459 = vadd.f32 0.0, %v458
    %v460 = vpop.f32.mrb[0].mxu0
    %461 = vmatprep.mubr.bf16.mxu0 %v102
    %462 = vmatmul.mubr.bf16.gmra.mrb[0].mxu0 %v101
    %v463 = vpop.f32.mrb[0].mxu0
    %v464 = vadd.f32 0.0, %v463
    %v465 = vpop.f32.mrb[0].mxu0
    %v466 = vpop.f32.mrb[0].mxu0
    %v467 = vadd.f32 0.0, %v466
    %v468 = vpop.f32.mrb[0].mxu0
    %469 = vmatprep.mubr.bf16.mxu0 %v104
    %470 = vmatmul.mubr.bf16.gmra.mrb[0].mxu0 %v103
    %v471 = vpop.f32.mrb[0].mxu0
    %v472 = vadd.f32 0.0, %v471
    %v473 = vpop.f32.mrb[0].mxu0
    %v474 = vpop.f32.mrb[0].mxu0
    %v475 = vadd.f32 0.0, %v474
    %v476 = vpop.f32.mrb[0].mxu0
    %477 = vmatprep.mubr.bf16.mxu0 %v106
    %478 = vmatmul.mubr.bf16.gmra.mrb[0].mxu0 %v105
    %v479 = vpop.f32.mrb[0].mxu0
    %v480 = vadd.f32 0.0, %v479
    %v481 = vpop.f32.mrb[0].mxu0
    %v482 = vpop.f32.mrb[0].mxu0
    %v483 = vadd.f32 0.0, %v482
    %v484 = vpop.f32.mrb[0].mxu0
    %485 = vmatprep.mubr.bf16.mxu0 %v108
    %486 = vmatmul.mubr.bf16.gmra.mrb[0].mxu0 %v107
    %v487 = vpop.f32.mrb[0].mxu0
    %v488 = vadd.f32 0.0, %v487
    %v489 = vpop.f32.mrb[0].mxu0
    %v490 = vpop.f32.mrb[0].mxu0
    %v491 = vadd.f32 0.0, %v490
    %v492 = vpop.f32.mrb[0].mxu0
    %493 = vmatprep.mubr.bf16.mxu0 %v110
    %494 = vmatmul.mubr.bf16.gmra.mrb[0].mxu0 %v109
    %v495 = vpop.f32.mrb[0].mxu0
    %v496 = vadd.f32 0.0, %v495
    %v497 = vpop.f32.mrb[0].mxu0
    %v498 = vpop.f32.mrb[0].mxu0
    %v499 = vadd.f32 0.0, %v498
    %v500 = vpop.f32.mrb[0].mxu0
    %501 = vmatprep.mubr.bf16.mxu0 %v112
    %502 = vmatmul.mubr.bf16.gmra.mrb[0].mxu0 %v111
    %v503 = vpop.f32.mrb[0].mxu0
    %v504 = vadd.f32 0.0, %v503
    %v505 = vpop.f32.mrb[0].mxu0
    %v506 = vpop.f32.mrb[0].mxu0
    %v507 = vadd.f32 0.0, %v506
    %v508 = vpop.f32.mrb[0].mxu0
    %509 = vmatprep.mubr.bf16.mxu0 %v114
    %510 = vmatmul.mubr.bf16.gmra.mrb[0].mxu0 %v113
    %v511 = vpop.f32.mrb[0].mxu0
    %v512 = vadd.f32 0.0, %v511
    %v513 = vpop.f32.mrb[0].mxu0
    %v514 = vpop.f32.mrb[0].mxu0
    %v515 = vadd.f32 0.0, %v514
    %v516 = vpop.f32.mrb[0].mxu0
    %517 = vmatprep.mubr.bf16.mxu0 %v116
    %518 = vmatmul.mubr.bf16.gmra.mrb[0].mxu0 %v115
    %v519 = vpop.f32.mrb[0].mxu0
    %v520 = vadd.f32 0.0, %v519
    %v521 = vpop.f32.mrb[0].mxu0
    %v522 = vpop.f32.mrb[0].mxu0
    %v523 = vadd.f32 0.0, %v522
    %v524 = vpop.f32.mrb[0].mxu0
    %525 = vmatprep.mubr.bf16.mxu0 %v118
    %526 = vmatmul.mubr.bf16.gmra.mrb[0].mxu0 %v117
    %v527 = vpop.f32.mrb[0].mxu0
    %v528 = vadd.f32 0.0, %v527
    %v529 = vpop.f32.mrb[0].mxu0
    %v530 = vpop.f32.mrb[0].mxu0
    %v531 = vadd.f32 0.0, %v530
    %v532 = vpop.f32.mrb[0].mxu0
    %533 = vmatprep.mubr.bf16.mxu0 %v120
    %534 = vmatmul.mubr.bf16.gmra.mrb[0].mxu0 %v119
    %v535 = vpop.f32.mrb[0].mxu0
    %v536 = vadd.f32 0.0, %v535
    %v537 = vpop.f32.mrb[0].mxu0
    %v538 = vpop.f32.mrb[0].mxu0
    %v539 = vadd.f32 0.0, %v538
    %v540 = vpop.f32.mrb[0].mxu0
    %541 = vmatprep.mubr.bf16.mxu0 %v122
    %542 = vmatmul.mubr.bf16.gmra.mrb[0].mxu0 %v121
    %v543 = vpop.f32.mrb[0].mxu0
    %v544 = vadd.f32 0.0, %v543
    %v545 = vpop.f32.mrb[0].mxu0
    %v546 = vpop.f32.mrb[0].mxu0
    %v547 = vadd.f32 0.0, %v546
    %v548 = vpop.f32.mrb[0].mxu0
    %549 = vmatprep.mubr.bf16.mxu0 %v124
    %550 = vmatmul.mubr.bf16.gmra.mrb[0].mxu0 %v123
    %v551 = vpop.f32.mrb[0].mxu0
    %v552 = vadd.f32 0.0, %v551
    %v553 = vpop.f32.mrb[0].mxu0
    %v554 = vpop.f32.mrb[0].mxu0
    %v555 = vadd.f32 0.0, %v554
    %v556 = vpop.f32.mrb[0].mxu0
    %557 = vmatprep.mubr.bf16.mxu0 %v126
    %558 = vmatmul.mubr.bf16.gmra.mrb[0].mxu0 %v125
    %v559 = vpop.f32.mrb[0].mxu0
    %v560 = vadd.f32 0.0, %v559
    %v561 = vpop.f32.mrb[0].mxu0
    %v562 = vpop.f32.mrb[0].mxu0
    %v563 = vadd.f32 0.0, %v562
    %v564 = vpop.f32.mrb[0].mxu0
    %565 = vmatprep.mubr.bf16.mxu0 %v128
    %566 = vmatmul.mubr.bf16.gmra.mrb[0].mxu0 %v127
    %v567 = vpop.f32.mrb[0].mxu0
    %v568 = vadd.f32 0.0, %v567
    %v569 = vpop.f32.mrb[0].mxu0
    %v570 = vpop.f32.mrb[0].mxu0
    %v571 = vadd.f32 0.0, %v570
    %v572 = vpop.f32.mrb[0].mxu0
    %573 = vmatprep.mubr.bf16.mxu0 %v130
    %574 = vmatmul.mubr.bf16.gmra.mrb[0].mxu0 %v129
    %v575 = vpop.f32.mrb[0].mxu0
    %v576 = vadd.f32 0.0, %v575
    %v577 = vpop.f32.mrb[0].mxu0
    %v578 = vpop.f32.mrb[0].mxu0
    %v579 = vadd.f32 0.0, %v578
    %v580 = vpop.f32.mrb[0].mxu0
    %581 = vdwg.mxu0
    %v582 = vmax.f32 %v456, 0.0
    %v583 = vmax.f32 %v459, 0.0
    %v584 = vmax.f32 %v464, 0.0
    %v585 = vmax.f32 %v467, 0.0
    %v586 = vmax.f32 %v472, 0.0
    %v587 = vmax.f32 %v475, 0.0
    %v588 = vmax.f32 %v480, 0.0
    %v589 = vmax.f32 %v483, 0.0
    %v590 = vmax.f32 %v488, 0.0
    %v591 = vmax.f32 %v491, 0.0
    %v592 = vmax.f32 %v496, 0.0
    %v593 = vmax.f32 %v499, 0.0
    %v594 = vmax.f32 %v504, 0.0
    %v595 = vmax.f32 %v507, 0.0
    %v596 = vmax.f32 %v512, 0.0
    %v597 = vmax.f32 %v515, 0.0
    %v598 = vmax.f32 %v520, 0.0
    %v599 = vmax.f32 %v523, 0.0
    %v600 = vmax.f32 %v528, 0.0
    %v601 = vmax.f32 %v531, 0.0
    %v602 = vmax.f32 %v536, 0.0
    %v603 = vmax.f32 %v539, 0.0
    %v604 = vmax.f32 %v544, 0.0
    %v605 = vmax.f32 %v547, 0.0
    %v606 = vmax.f32 %v552, 0.0
    %v607 = vmax.f32 %v555, 0.0
    %v608 = vmax.f32 %v560, 0.0
    %v609 = vmax.f32 %v563, 0.0
    %v610 = vmax.f32 %v568, 0.0
    %v611 = vmax.f32 %v571, 0.0
    %v612 = vmax.f32 %v576, 0.0
    %v613 = vmax.f32 %v579, 0.0
    %v614 = vpack.c.bf16 %v583, %v582
    %v615 = vpack.c.bf16 %v585, %v584
    %v616 = vpack.c.bf16 %v587, %v586
    %v617 = vpack.c.bf16 %v589, %v588
    %v618 = vpack.c.bf16 %v591, %v590
    %v619 = vpack.c.bf16 %v593, %v592
    %v620 = vpack.c.bf16 %v595, %v594
    %v621 = vpack.c.bf16 %v597, %v596
    %v622 = vpack.c.bf16 %v599, %v598
    %v623 = vpack.c.bf16 %v601, %v600
    %v624 = vpack.c.bf16 %v603, %v602
    %v625 = vpack.c.bf16 %v605, %v604
    %v626 = vpack.c.bf16 %v607, %v606
    %v627 = vpack.c.bf16 %v609, %v608
    %v628 = vpack.c.bf16 %v611, %v610
    %v629 = vpack.c.bf16 %v613, %v612
    %v630 = vld [vmem:[%s3] sm:$0xf]
    %v631 = vld [vmem:[%s3 + $0x4] sm:$0xf]
    %v632 = vld [vmem:[%s3 + $0x8] sm:$0xf]
    %v633 = vld [vmem:[%s3 + $0xc] sm:$0xf]
    %v634 = vld [vmem:[%s3 + $0x10] sm:$0xf]
    %v635 = vld [vmem:[%s3 + $0x14] sm:$0xf]
    %v636 = vld [vmem:[%s3 + $0x18] sm:$0xf]
    %v637 = vld [vmem:[%s3 + $0x1c] sm:$0xf]
    %v638 = vld [vmem:[%s3 + $0x20] sm:$0xf]
    %v639 = vld [vmem:[%s3 + $0x24] sm:$0xf]
    %v640 = vld [vmem:[%s3 + $0x28] sm:$0xf]
    %v641 = vld [vmem:[%s3 + $0x2c] sm:$0xf]
    %v642 = vld [vmem:[%s3 + $0x30] sm:$0xf]
    %v643 = vld [vmem:[%s3 + $0x34] sm:$0xf]
    %v644 = vld [vmem:[%s3 + $0x38] sm:$0xf]
    %v645 = vld [vmem:[%s3 + $0x3c] sm:$0xf]
    %v662 = vunpack.c.l.b16 %v630
    %v663 = vunpack.c.l.b16 %v631
    %v664 = vunpack.c.l.b16 %v632
    %v665 = vunpack.c.l.b16 %v633
    %v666 = vunpack.c.l.b16 %v634
    %v667 = vunpack.c.l.b16 %v635
    %v668 = vunpack.c.l.b16 %v636
    %v669 = vunpack.c.l.b16 %v637
    %v670 = vunpack.c.l.b16 %v638
    %v671 = vunpack.c.l.b16 %v639
    %v672 = vunpack.c.l.b16 %v640
    %v673 = vunpack.c.l.b16 %v641
    %v674 = vunpack.c.l.b16 %v642
    %v675 = vunpack.c.l.b16 %v643
    %v676 = vunpack.c.l.b16 %v644
    %v677 = vunpack.c.l.b16 %v645
    %v678 = vpack.c.b16 %v663, %v662
    %v679 = vpack.c.b16 %v665, %v664
    %v680 = vpack.c.b16 %v667, %v666
    %v681 = vpack.c.b16 %v669, %v668
    %v682 = vpack.c.b16 %v671, %v670
    %v683 = vpack.c.b16 %v673, %v672
    %v684 = vpack.c.b16 %v675, %v674
    %v685 = vpack.c.b16 %v677, %v676
    %694 = vmatprep.subr.bf16.mxu0 0
    %695 = vmatpush1.bf16.msra.mxu0 %v678
    %696 = vmatprep.subr.bf16.mxu0 0
    %697 = vmatpush1.bf16.msra.mxu0 %v679
    %698 = vmatprep.subr.bf16.mxu0 0
    %699 = vmatpush1.bf16.msra.mxu0 %v680
    %700 = vmatprep.subr.bf16.mxu0 0
    %701 = vmatpush1.bf16.msra.mxu0 %v681
    %702 = vmatprep.subr.bf16.mxu0 0
    %703 = vmatpush1.bf16.msra.mxu0 %v682
    %704 = vmatprep.subr.bf16.mxu0 0
    %705 = vmatpush1.bf16.msra.mxu0 %v683
    %706 = vmatprep.subr.bf16.mxu0 0
    %707 = vmatpush1.bf16.msra.mxu0 %v684
    %708 = vmatprep.subr.bf16.mxu0 0
    %709 = vmatpush1.bf16.msra.mxu0 %v685
    %710 = vmatprep.subr.bf16.mxu0 0
    %711 = vmatpush1.bf16.msra.mxu0 0
    %712 = vmatprep.subr.bf16.mxu0 0
    %713 = vmatpush1.bf16.msra.mxu0 0
    %714 = vmatprep.subr.bf16.mxu0 0
    %715 = vmatpush1.bf16.msra.mxu0 0
    %716 = vmatprep.subr.bf16.mxu0 0
    %717 = vmatpush1.bf16.msra.mxu0 0
    %718 = vmatprep.subr.bf16.mxu0 0
    %719 = vmatpush1.bf16.msra.mxu0 0
    %720 = vmatprep.subr.bf16.mxu0 0
    %721 = vmatpush1.bf16.msra.mxu0 0
    %722 = vmatprep.subr.bf16.mxu0 0
    %723 = vmatpush1.bf16.msra.mxu0 0
    %724 = vmatprep.subr.bf16.mxu0 0
    %725 = vmatpush1.bf16.msra.mxu0 0
    %726 = vmatprep.mubr.bf16.mxu0 0
    %727 = vmatmul.mubr.bf16.gmra.mrb[0].mxu0 %v614
    %v728 = vpop.f32.mrb[0].mxu0
    %v729 = vadd.f32 0.0, %v728
    %v730 = vpop.f32.mrb[0].mxu0
    %v731 = vpop.f32.mrb[0].mxu0
    %v732 = vadd.f32 0.0, %v731
    %v733 = vpop.f32.mrb[0].mxu0
    %734 = vmatprep.mubr.bf16.mxu0 0
    %735 = vmatmul.mubr.bf16.gmra.mrb[0].mxu0 %v615
    %v736 = vpop.f32.mrb[0].mxu0
    %v737 = vadd.f32 0.0, %v736
    %v738 = vpop.f32.mrb[0].mxu0
    %v739 = vpop.f32.mrb[0].mxu0
    %v740 = vadd.f32 0.0, %v739
    %v741 = vpop.f32.mrb[0].mxu0
    %742 = vmatprep.mubr.bf16.mxu0 0
    %743 = vmatmul.mubr.bf16.gmra.mrb[0].mxu0 %v616
    %v744 = vpop.f32.mrb[0].mxu0
    %v745 = vadd.f32 0.0, %v744
    %v746 = vpop.f32.mrb[0].mxu0
    %v747 = vpop.f32.mrb[0].mxu0
    %v748 = vadd.f32 0.0, %v747
    %v749 = vpop.f32.mrb[0].mxu0
    %750 = vmatprep.mubr.bf16.mxu0 0
    %751 = vmatmul.mubr.bf16.gmra.mrb[0].mxu0 %v617
    %v752 = vpop.f32.mrb[0].mxu0
    %v753 = vadd.f32 0.0, %v752
    %v754 = vpop.f32.mrb[0].mxu0
    %v755 = vpop.f32.mrb[0].mxu0
    %v756 = vadd.f32 0.0, %v755
    %v757 = vpop.f32.mrb[0].mxu0
    %758 = vmatprep.mubr.bf16.mxu0 0
    %759 = vmatmul.mubr.bf16.gmra.mrb[0].mxu0 %v618
    %v760 = vpop.f32.mrb[0].mxu0
    %v761 = vadd.f32 0.0, %v760
    %v762 = vpop.f32.mrb[0].mxu0
    %v763 = vpop.f32.mrb[0].mxu0
    %v764 = vadd.f32 0.0, %v763
    %v765 = vpop.f32.mrb[0].mxu0
    %766 = vmatprep.mubr.bf16.mxu0 0
    %767 = vmatmul.mubr.bf16.gmra.mrb[0].mxu0 %v619
    %v768 = vpop.f32.mrb[0].mxu0
    %v769 = vadd.f32 0.0, %v768
    %v770 = vpop.f32.mrb[0].mxu0
    %v771 = vpop.f32.mrb[0].mxu0
    %v772 = vadd.f32 0.0, %v771
    %v773 = vpop.f32.mrb[0].mxu0
    %774 = vmatprep.mubr.bf16.mxu0 0
    %775 = vmatmul.mubr.bf16.gmra.mrb[0].mxu0 %v620
    %v776 = vpop.f32.mrb[0].mxu0
    %v777 = vadd.f32 0.0, %v776
    %v778 = vpop.f32.mrb[0].mxu0
    %v779 = vpop.f32.mrb[0].mxu0
    %v780 = vadd.f32 0.0, %v779
    %v781 = vpop.f32.mrb[0].mxu0
    %782 = vmatprep.mubr.bf16.mxu0 0
    %783 = vmatmul.mubr.bf16.gmra.mrb[0].mxu0 %v621
    %v784 = vpop.f32.mrb[0].mxu0
    %v785 = vadd.f32 0.0, %v784
    %v786 = vpop.f32.mrb[0].mxu0
    %v787 = vpop.f32.mrb[0].mxu0
    %v788 = vadd.f32 0.0, %v787
    %v789 = vpop.f32.mrb[0].mxu0
    %790 = vmatprep.mubr.bf16.mxu0 0
    %791 = vmatmul.mubr.bf16.gmra.mrb[0].mxu0 %v622
    %v792 = vpop.f32.mrb[0].mxu0
    %v793 = vadd.f32 0.0, %v792
    %v794 = vpop.f32.mrb[0].mxu0
    %v795 = vpop.f32.mrb[0].mxu0
    %v796 = vadd.f32 0.0, %v795
    %v797 = vpop.f32.mrb[0].mxu0
    %798 = vmatprep.mubr.bf16.mxu0 0
    %799 = vmatmul.mubr.bf16.gmra.mrb[0].mxu0 %v623
    %v800 = vpop.f32.mrb[0].mxu0
    %v801 = vadd.f32 0.0, %v800
    %v802 = vpop.f32.mrb[0].mxu0
    %v803 = vpop.f32.mrb[0].mxu0
    %v804 = vadd.f32 0.0, %v803
    %v805 = vpop.f32.mrb[0].mxu0
    %806 = vmatprep.mubr.bf16.mxu0 0
    %807 = vmatmul.mubr.bf16.gmra.mrb[0].mxu0 %v624
    %v808 = vpop.f32.mrb[0].mxu0
    %v809 = vadd.f32 0.0, %v808
    %v810 = vpop.f32.mrb[0].mxu0
    %v811 = vpop.f32.mrb[0].mxu0
    %v812 = vadd.f32 0.0, %v811
    %v813 = vpop.f32.mrb[0].mxu0
    %814 = vmatprep.mubr.bf16.mxu0 0
    %815 = vmatmul.mubr.bf16.gmra.mrb[0].mxu0 %v625
    %v816 = vpop.f32.mrb[0].mxu0
    %v817 = vadd.f32 0.0, %v816
    %v818 = vpop.f32.mrb[0].mxu0
    %v819 = vpop.f32.mrb[0].mxu0
    %v820 = vadd.f32 0.0, %v819
    %v821 = vpop.f32.mrb[0].mxu0
    %822 = vmatprep.mubr.bf16.mxu0 0
    %823 = vmatmul.mubr.bf16.gmra.mrb[0].mxu0 %v626
    %v824 = vpop.f32.mrb[0].mxu0
    %v825 = vadd.f32 0.0, %v824
    %v826 = vpop.f32.mrb[0].mxu0
    %v827 = vpop.f32.mrb[0].mxu0
    %v828 = vadd.f32 0.0, %v827
    %v829 = vpop.f32.mrb[0].mxu0
    %830 = vmatprep.mubr.bf16.mxu0 0
    %831 = vmatmul.mubr.bf16.gmra.mrb[0].mxu0 %v627
    %v832 = vpop.f32.mrb[0].mxu0
    %v833 = vadd.f32 0.0, %v832
    %v834 = vpop.f32.mrb[0].mxu0
    %v835 = vpop.f32.mrb[0].mxu0
    %v836 = vadd.f32 0.0, %v835
    %v837 = vpop.f32.mrb[0].mxu0
    %838 = vmatprep.mubr.bf16.mxu0 0
    %839 = vmatmul.mubr.bf16.gmra.mrb[0].mxu0 %v628
    %v840 = vpop.f32.mrb[0].mxu0
    %v841 = vadd.f32 0.0, %v840
    %v842 = vpop.f32.mrb[0].mxu0
    %v843 = vpop.f32.mrb[0].mxu0
    %v844 = vadd.f32 0.0, %v843
    %v845 = vpop.f32.mrb[0].mxu0
    %846 = vmatprep.mubr.bf16.mxu0 0
    %847 = vmatmul.mubr.bf16.gmra.mrb[0].mxu0 %v629
    %v848 = vpop.f32.mrb[0].mxu0
    %v849 = vadd.f32 0.0, %v848
    %v850 = vpop.f32.mrb[0].mxu0
    %v851 = vpop.f32.mrb[0].mxu0
    %v852 = vadd.f32 0.0, %v851
    %v853 = vpop.f32.mrb[0].mxu0
    %854 = vdwg.mxu0
    %v855 = vpack.c.bf16 %v732, %v729
    %v856 = vpack.c.bf16 %v740, %v737
    %v857 = vpack.c.bf16 %v748, %v745
    %v858 = vpack.c.bf16 %v756, %v753
    %v859 = vpack.c.bf16 %v764, %v761
    %v860 = vpack.c.bf16 %v772, %v769
    %v861 = vpack.c.bf16 %v780, %v777
    %v862 = vpack.c.bf16 %v788, %v785
    %v863 = vpack.c.bf16 %v796, %v793
    %v864 = vpack.c.bf16 %v804, %v801
    %v865 = vpack.c.bf16 %v812, %v809
    %v866 = vpack.c.bf16 %v820, %v817
    %v867 = vpack.c.bf16 %v828, %v825
    %v868 = vpack.c.bf16 %v836, %v833
    %v869 = vpack.c.bf16 %v844, %v841
    %v870 = vpack.c.bf16 %v852, %v849
    %871 = vmatprep.subr.bf16.mxu0 0
    %872 = vmatpush1.bf16.msra.mxu0 %v855
    %873 = vmatprep.subr.bf16.mxu0 0
    %874 = vmatpush1.bf16.msra.mxu0 %v856
    %875 = vmatprep.subr.bf16.mxu0 0
    %876 = vmatpush1.bf16.msra.mxu0 %v857
    %877 = vmatprep.subr.bf16.mxu0 0
    %878 = vmatpush1.bf16.msra.mxu0 %v858
    %879 = vmatprep.subr.bf16.mxu0 0
    %880 = vmatpush1.bf16.msra.mxu0 %v859
    %881 = vmatprep.subr.bf16.mxu0 0
    %882 = vmatpush1.bf16.msra.mxu0 %v860
    %883 = vmatprep.subr.bf16.mxu0 0
    %884 = vmatpush1.bf16.msra.mxu0 %v861
    %885 = vmatprep.subr.bf16.mxu0 0
    %886 = vmatpush1.bf16.msra.mxu0 %v862
    %887 = vmatprep.subr.bf16.mxu0 0
    %888 = vmatpush1.bf16.msra.mxu0 %v863
    %889 = vmatprep.subr.bf16.mxu0 0
    %890 = vmatpush1.bf16.msra.mxu0 %v864
    %891 = vmatprep.subr.bf16.mxu0 0
    %892 = vmatpush1.bf16.msra.mxu0 %v865
    %893 = vmatprep.subr.bf16.mxu0 0
    %894 = vmatpush1.bf16.msra.mxu0 %v866
    %895 = vmatprep.subr.bf16.mxu0 0
    %896 = vmatpush1.bf16.msra.mxu0 %v867
    %897 = vmatprep.subr.bf16.mxu0 0
    %898 = vmatpush1.bf16.msra.mxu0 %v868
    %899 = vmatprep.subr.bf16.mxu0 0
    %900 = vmatpush1.bf16.msra.mxu0 %v869
    %901 = vmatprep.subr.bf16.mxu0 0
    %902 = vmatpush1.bf16.msra.mxu0 %v870
    %903 = vmatprep.mubr.bf16.mxu0 %v100
    %904 = vmatmul.mubr.bf16.gmra.mrb[0].mxu0 %v99
    %v905 = vpop.f32.mrb[0].mxu0
    %v906 = vadd.f32 0.0, %v905
    %v907 = vpop.f32.mrb[0].mxu0
    %v908 = vpop.f32.mrb[0].mxu0
    %v909 = vadd.f32 0.0, %v908
    %v910 = vpop.f32.mrb[0].mxu0
    %911 = vmatprep.mubr.bf16.mxu0 %v102
    %912 = vmatmul.mubr.bf16.gmra.mrb[0].mxu0 %v101
    %v913 = vpop.f32.mrb[0].mxu0
    %v914 = vadd.f32 0.0, %v913
    %v915 = vpop.f32.mrb[0].mxu0
    %v916 = vpop.f32.mrb[0].mxu0
    %v917 = vadd.f32 0.0, %v916
    %v918 = vpop.f32.mrb[0].mxu0
    %919 = vmatprep.mubr.bf16.mxu0 %v104
    %920 = vmatmul.mubr.bf16.gmra.mrb[0].mxu0 %v103
    %v921 = vpop.f32.mrb[0].mxu0
    %v922 = vadd.f32 0.0, %v921
    %v923 = vpop.f32.mrb[0].mxu0
    %v924 = vpop.f32.mrb[0].mxu0
    %v925 = vadd.f32 0.0, %v924
    %v926 = vpop.f32.mrb[0].mxu0
    %927 = vmatprep.mubr.bf16.mxu0 %v106
    %928 = vmatmul.mubr.bf16.gmra.mrb[0].mxu0 %v105
    %v929 = vpop.f32.mrb[0].mxu0
    %v930 = vadd.f32 0.0, %v929
    %v931 = vpop.f32.mrb[0].mxu0
    %v932 = vpop.f32.mrb[0].mxu0
    %v933 = vadd.f32 0.0, %v932
    %v934 = vpop.f32.mrb[0].mxu0
    %935 = vmatprep.mubr.bf16.mxu0 %v108
    %936 = vmatmul.mubr.bf16.gmra.mrb[0].mxu0 %v107
    %v937 = vpop.f32.mrb[0].mxu0
    %v938 = vadd.f32 0.0, %v937
    %v939 = vpop.f32.mrb[0].mxu0
    %v940 = vpop.f32.mrb[0].mxu0
    %v941 = vadd.f32 0.0, %v940
    %v942 = vpop.f32.mrb[0].mxu0
    %943 = vmatprep.mubr.bf16.mxu0 %v110
    %944 = vmatmul.mubr.bf16.gmra.mrb[0].mxu0 %v109
    %v945 = vpop.f32.mrb[0].mxu0
    %v946 = vadd.f32 0.0, %v945
    %v947 = vpop.f32.mrb[0].mxu0
    %v948 = vpop.f32.mrb[0].mxu0
    %v949 = vadd.f32 0.0, %v948
    %v950 = vpop.f32.mrb[0].mxu0
    %951 = vmatprep.mubr.bf16.mxu0 %v112
    %952 = vmatmul.mubr.bf16.gmra.mrb[0].mxu0 %v111
    %v953 = vpop.f32.mrb[0].mxu0
    %v954 = vadd.f32 0.0, %v953
    %v955 = vpop.f32.mrb[0].mxu0
    %v956 = vpop.f32.mrb[0].mxu0
    %v957 = vadd.f32 0.0, %v956
    %v958 = vpop.f32.mrb[0].mxu0
    %959 = vmatprep.mubr.bf16.mxu0 %v114
    %960 = vmatmul.mubr.bf16.gmra.mrb[0].mxu0 %v113
    %v961 = vpop.f32.mrb[0].mxu0
    %v962 = vadd.f32 0.0, %v961
    %v963 = vpop.f32.mrb[0].mxu0
    %v964 = vpop.f32.mrb[0].mxu0
    %v965 = vadd.f32 0.0, %v964
    %v966 = vpop.f32.mrb[0].mxu0
    %967 = vmatprep.mubr.bf16.mxu0 %v116
    %968 = vmatmul.mubr.bf16.gmra.mrb[0].mxu0 %v115
    %v969 = vpop.f32.mrb[0].mxu0
    %v970 = vadd.f32 0.0, %v969
    %v971 = vpop.f32.mrb[0].mxu0
    %v972 = vpop.f32.mrb[0].mxu0
    %v973 = vadd.f32 0.0, %v972
    %v974 = vpop.f32.mrb[0].mxu0
    %975 = vmatprep.mubr.bf16.mxu0 %v118
    %976 = vmatmul.mubr.bf16.gmra.mrb[0].mxu0 %v117
    %v977 = vpop.f32.mrb[0].mxu0
    %v978 = vadd.f32 0.0, %v977
    %v979 = vpop.f32.mrb[0].mxu0
    %v980 = vpop.f32.mrb[0].mxu0
    %v981 = vadd.f32 0.0, %v980
    %v982 = vpop.f32.mrb[0].mxu0
    %983 = vmatprep.mubr.bf16.mxu0 %v120
    %984 = vmatmul.mubr.bf16.gmra.mrb[0].mxu0 %v119
    %v985 = vpop.f32.mrb[0].mxu0
    %v986 = vadd.f32 0.0, %v985
    %v987 = vpop.f32.mrb[0].mxu0
    %v988 = vpop.f32.mrb[0].mxu0
    %v989 = vadd.f32 0.0, %v988
    %v990 = vpop.f32.mrb[0].mxu0
    %991 = vmatprep.mubr.bf16.mxu0 %v122
    %992 = vmatmul.mubr.bf16.gmra.mrb[0].mxu0 %v121
    %v993 = vpop.f32.mrb[0].mxu0
    %v994 = vadd.f32 0.0, %v993
    %v995 = vpop.f32.mrb[0].mxu0
    %v996 = vpop.f32.mrb[0].mxu0
    %v997 = vadd.f32 0.0, %v996
    %v998 = vpop.f32.mrb[0].mxu0
    %999 = vmatprep.mubr.bf16.mxu0 %v124
    %1000 = vmatmul.mubr.bf16.gmra.mrb[0].mxu0 %v123
    %v1001 = vpop.f32.mrb[0].mxu0
    %v1002 = vadd.f32 0.0, %v1001
    %v1003 = vpop.f32.mrb[0].mxu0
    %v1004 = vpop.f32.mrb[0].mxu0
    %v1005 = vadd.f32 0.0, %v1004
    %v1006 = vpop.f32.mrb[0].mxu0
    %1007 = vmatprep.mubr.bf16.mxu0 %v126
    %1008 = vmatmul.mubr.bf16.gmra.mrb[0].mxu0 %v125
    %v1009 = vpop.f32.mrb[0].mxu0
    %v1010 = vadd.f32 0.0, %v1009
    %v1011 = vpop.f32.mrb[0].mxu0
    %v1012 = vpop.f32.mrb[0].mxu0
    %v1013 = vadd.f32 0.0, %v1012
    %v1014 = vpop.f32.mrb[0].mxu0
    %1015 = vmatprep.mubr.bf16.mxu0 %v128
    %1016 = vmatmul.mubr.bf16.gmra.mrb[0].mxu0 %v127
    %v1017 = vpop.f32.mrb[0].mxu0
    %v1018 = vadd.f32 0.0, %v1017
    %v1019 = vpop.f32.mrb[0].mxu0
    %v1020 = vpop.f32.mrb[0].mxu0
    %v1021 = vadd.f32 0.0, %v1020
    %v1022 = vpop.f32.mrb[0].mxu0
    %1023 = vmatprep.mubr.bf16.mxu0 %v130
    %1024 = vmatmul.mubr.bf16.gmra.mrb[0].mxu0 %v129
    %v1025 = vpop.f32.mrb[0].mxu0
    %v1026 = vadd.f32 0.0, %v1025
    %v1027 = vpop.f32.mrb[0].mxu0
    %v1028 = vpop.f32.mrb[0].mxu0
    %v1029 = vadd.f32 0.0, %v1028
    %v1030 = vpop.f32.mrb[0].mxu0
    %1031 = vdwg.mxu0
    %vm1032 = vcmask 130048
    %1033 = vst.msk [vmem:[%s5] sm:$0xff] %vm1032, %v906
    %1034 = vst.msk [vmem:[%s5 + $0x8] sm:$0xff] %vm1032, %v909
    %1035 = vst.msk [vmem:[%s5 + $0x10] sm:$0xff] %vm1032, %v914
    %1036 = vst.msk [vmem:[%s5 + $0x18] sm:$0xff] %vm1032, %v917
    %1037 = vst.msk [vmem:[%s5 + $0x20] sm:$0xff] %vm1032, %v922
    %1038 = vst.msk [vmem:[%s5 + $0x28] sm:$0xff] %vm1032, %v925
    %1039 = vst.msk [vmem:[%s5 + $0x30] sm:$0xff] %vm1032, %v930
    %1040 = vst.msk [vmem:[%s5 + $0x38] sm:$0xff] %vm1032, %v933
    %1041 = vst.msk [vmem:[%s5 + $0x40] sm:$0xff] %vm1032, %v938
    %1042 = vst.msk [vmem:[%s5 + $0x48] sm:$0xff] %vm1032, %v941
    %1043 = vst.msk [vmem:[%s5 + $0x50] sm:$0xff] %vm1032, %v946
    %1044 = vst.msk [vmem:[%s5 + $0x58] sm:$0xff] %vm1032, %v949
    %1045 = vst.msk [vmem:[%s5 + $0x60] sm:$0xff] %vm1032, %v954
    %1046 = vst.msk [vmem:[%s5 + $0x68] sm:$0xff] %vm1032, %v957
    %1047 = vst.msk [vmem:[%s5 + $0x70] sm:$0xff] %vm1032, %v962
    %1048 = vst.msk [vmem:[%s5 + $0x78] sm:$0xff] %vm1032, %v965
    %1049 = vst.msk [vmem:[%s5 + $0x80] sm:$0xff] %vm1032, %v970
    %1050 = vst.msk [vmem:[%s5 + $0x88] sm:$0xff] %vm1032, %v973
    %1051 = vst.msk [vmem:[%s5 + $0x90] sm:$0xff] %vm1032, %v978
    %1052 = vst.msk [vmem:[%s5 + $0x98] sm:$0xff] %vm1032, %v981
    %1053 = vst.msk [vmem:[%s5 + $0xa0] sm:$0xff] %vm1032, %v986
    %1054 = vst.msk [vmem:[%s5 + $0xa8] sm:$0xff] %vm1032, %v989
    %1055 = vst.msk [vmem:[%s5 + $0xb0] sm:$0xff] %vm1032, %v994
    %1056 = vst.msk [vmem:[%s5 + $0xb8] sm:$0xff] %vm1032, %v997
    %1057 = vst.msk [vmem:[%s5 + $0xc0] sm:$0xff] %vm1032, %v1002
    %1058 = vst.msk [vmem:[%s5 + $0xc8] sm:$0xff] %vm1032, %v1005
    %1059 = vst.msk [vmem:[%s5 + $0xd0] sm:$0xff] %vm1032, %v1010
    %1060 = vst.msk [vmem:[%s5 + $0xd8] sm:$0xff] %vm1032, %v1013
    %1061 = vst.msk [vmem:[%s5 + $0xe0] sm:$0xff] %vm1032, %v1018
    %1062 = vst.msk [vmem:[%s5 + $0xe8] sm:$0xff] %vm1032, %v1021
    %1063 = vst.msk [vmem:[%s5 + $0xf0] sm:$0xff] %vm1032, %v1026
    %1064 = vst.msk [vmem:[%s5 + $0xf8] sm:$0xff] %vm1032, %v1029
    %v1065 = vpack.c.bf16 %v909, %v906
    %v1066 = vpack.c.bf16 %v917, %v914
    %v1067 = vpack.c.bf16 %v925, %v922
    %v1068 = vpack.c.bf16 %v933, %v930
    %v1069 = vpack.c.bf16 %v941, %v938
    %v1070 = vpack.c.bf16 %v949, %v946
    %v1071 = vpack.c.bf16 %v957, %v954
    %v1072 = vpack.c.bf16 %v965, %v962
    %v1073 = vpack.c.bf16 %v973, %v970
    %v1074 = vpack.c.bf16 %v981, %v978
    %v1075 = vpack.c.bf16 %v989, %v986
    %v1076 = vpack.c.bf16 %v997, %v994
    %v1077 = vpack.c.bf16 %v1005, %v1002
    %v1078 = vpack.c.bf16 %v1013, %v1010
    %v1079 = vpack.c.bf16 %v1021, %v1018
    %v1080 = vpack.c.bf16 %v1029, %v1026
    %1081 = vmatprep.subr.bf16.mxu0 0
    %1082 = vmatpush1.bf16.xpose.msra.mxu0 %v1065
    %1083 = vmatprep.subr.bf16.mxu0 0
    %1084 = vmatpush1.bf16.xpose.msra.mxu0 %v1066
    %1085 = vmatprep.subr.bf16.mxu0 0
    %1086 = vmatpush1.bf16.xpose.msra.mxu0 %v1067
    %1087 = vmatprep.subr.bf16.mxu0 0
    %1088 = vmatpush1.bf16.xpose.msra.mxu0 %v1068
    %1089 = vmatprep.subr.bf16.mxu0 0
    %1090 = vmatpush1.bf16.xpose.msra.mxu0 %v1069
    %1091 = vmatprep.subr.bf16.mxu0 0
    %1092 = vmatpush1.bf16.xpose.msra.mxu0 %v1070
    %1093 = vmatprep.subr.bf16.mxu0 0
    %1094 = vmatpush1.bf16.xpose.msra.mxu0 %v1071
    %1095 = vmatprep.subr.bf16.mxu0 0
    %1096 = vmatpush1.bf16.xpose.msra.mxu0 %v1072
    %1097 = vmatprep.subr.bf16.mxu0 0
    %1098 = vmatpush1.bf16.xpose.msra.mxu0 %v1073
    %1099 = vmatprep.subr.bf16.mxu0 0
    %1100 = vmatpush1.bf16.xpose.msra.mxu0 %v1074
    %1101 = vmatprep.subr.bf16.mxu0 0
    %1102 = vmatpush1.bf16.xpose.msra.mxu0 %v1075
    %1103 = vmatprep.subr.bf16.mxu0 0
    %1104 = vmatpush1.bf16.xpose.msra.mxu0 %v1076
    %1105 = vmatprep.subr.bf16.mxu0 0
    %1106 = vmatpush1.bf16.xpose.msra.mxu0 %v1077
    %1107 = vmatprep.subr.bf16.mxu0 0
    %1108 = vmatpush1.bf16.xpose.msra.mxu0 %v1078
    %1109 = vmatprep.subr.bf16.mxu0 0
    %1110 = vmatpush1.bf16.xpose.msra.mxu0 %v1079
    %1111 = vmatprep.subr.bf16.mxu0 0
    %1112 = vmatpush1.bf16.xpose.msra.mxu0 %v1080
    %1113 = vmatprep.mubr.bf16.mxu0 0
    %1114 = vmatmul.mubr.bf16.gmra.mrb[0].mxu0 %v1065
    %v1115 = vpop.f32.mrb[0].mxu0
    %v1116 = vadd.f32 0.0, %v1115
    %v1117 = vpop.f32.mrb[0].mxu0
    %v1118 = vadd.f32 0.0, %v1117
    %v1119 = vpop.f32.mrb[0].mxu0
    %v1120 = vadd.f32 0.0, %v1119
    %v1121 = vpop.f32.mrb[0].mxu0
    %v1122 = vadd.f32 0.0, %v1121
    %1123 = vmatprep.mubr.bf16.mxu0 0
    %1124 = vmatmul.mubr.bf16.gmra.mrb[0].mxu0 %v1066
    %v1125 = vpop.f32.mrb[0].mxu0
    %v1126 = vadd.f32 0.0, %v1125
    %v1127 = vpop.f32.mrb[0].mxu0
    %v1128 = vadd.f32 0.0, %v1127
    %v1129 = vpop.f32.mrb[0].mxu0
    %v1130 = vadd.f32 0.0, %v1129
    %v1131 = vpop.f32.mrb[0].mxu0
    %v1132 = vadd.f32 0.0, %v1131
    %1133 = vmatprep.mubr.bf16.mxu0 0
    %1134 = vmatmul.mubr.bf16.gmra.mrb[0].mxu0 %v1067
    %v1135 = vpop.f32.mrb[0].mxu0
    %v1136 = vadd.f32 0.0, %v1135
    %v1137 = vpop.f32.mrb[0].mxu0
    %v1138 = vadd.f32 0.0, %v1137
    %v1139 = vpop.f32.mrb[0].mxu0
    %v1140 = vadd.f32 0.0, %v1139
    %v1141 = vpop.f32.mrb[0].mxu0
    %v1142 = vadd.f32 0.0, %v1141
    %1143 = vmatprep.mubr.bf16.mxu0 0
    %1144 = vmatmul.mubr.bf16.gmra.mrb[0].mxu0 %v1068
    %v1145 = vpop.f32.mrb[0].mxu0
    %v1146 = vadd.f32 0.0, %v1145
    %v1147 = vpop.f32.mrb[0].mxu0
    %v1148 = vadd.f32 0.0, %v1147
    %v1149 = vpop.f32.mrb[0].mxu0
    %v1150 = vadd.f32 0.0, %v1149
    %v1151 = vpop.f32.mrb[0].mxu0
    %v1152 = vadd.f32 0.0, %v1151
    %1153 = vmatprep.mubr.bf16.mxu0 0
    %1154 = vmatmul.mubr.bf16.gmra.mrb[0].mxu0 %v1069
    %v1155 = vpop.f32.mrb[0].mxu0
    %v1156 = vadd.f32 0.0, %v1155
    %v1157 = vpop.f32.mrb[0].mxu0
    %v1158 = vadd.f32 0.0, %v1157
    %v1159 = vpop.f32.mrb[0].mxu0
    %v1160 = vadd.f32 0.0, %v1159
    %v1161 = vpop.f32.mrb[0].mxu0
    %v1162 = vadd.f32 0.0, %v1161
    %1163 = vmatprep.mubr.bf16.mxu0 0
    %1164 = vmatmul.mubr.bf16.gmra.mrb[0].mxu0 %v1070
    %v1165 = vpop.f32.mrb[0].mxu0
    %v1166 = vadd.f32 0.0, %v1165
    %v1167 = vpop.f32.mrb[0].mxu0
    %v1168 = vadd.f32 0.0, %v1167
    %v1169 = vpop.f32.mrb[0].mxu0
    %v1170 = vadd.f32 0.0, %v1169
    %v1171 = vpop.f32.mrb[0].mxu0
    %v1172 = vadd.f32 0.0, %v1171
    %1173 = vmatprep.mubr.bf16.mxu0 0
    %1174 = vmatmul.mubr.bf16.gmra.mrb[0].mxu0 %v1071
    %v1175 = vpop.f32.mrb[0].mxu0
    %v1176 = vadd.f32 0.0, %v1175
    %v1177 = vpop.f32.mrb[0].mxu0
    %v1178 = vadd.f32 0.0, %v1177
    %v1179 = vpop.f32.mrb[0].mxu0
    %v1180 = vadd.f32 0.0, %v1179
    %v1181 = vpop.f32.mrb[0].mxu0
    %v1182 = vadd.f32 0.0, %v1181
    %1183 = vmatprep.mubr.bf16.mxu0 0
    %1184 = vmatmul.mubr.bf16.gmra.mrb[0].mxu0 %v1072
    %v1185 = vpop.f32.mrb[0].mxu0
    %v1186 = vadd.f32 0.0, %v1185
    %v1187 = vpop.f32.mrb[0].mxu0
    %v1188 = vadd.f32 0.0, %v1187
    %v1189 = vpop.f32.mrb[0].mxu0
    %v1190 = vadd.f32 0.0, %v1189
    %v1191 = vpop.f32.mrb[0].mxu0
    %v1192 = vadd.f32 0.0, %v1191
    %1193 = vmatprep.mubr.bf16.mxu0 0
    %1194 = vmatmul.mubr.bf16.gmra.mrb[0].mxu0 %v1073
    %v1195 = vpop.f32.mrb[0].mxu0
    %v1196 = vadd.f32 0.0, %v1195
    %v1197 = vpop.f32.mrb[0].mxu0
    %v1198 = vadd.f32 0.0, %v1197
    %v1199 = vpop.f32.mrb[0].mxu0
    %v1200 = vadd.f32 0.0, %v1199
    %v1201 = vpop.f32.mrb[0].mxu0
    %v1202 = vadd.f32 0.0, %v1201
    %1203 = vmatprep.mubr.bf16.mxu0 0
    %1204 = vmatmul.mubr.bf16.gmra.mrb[0].mxu0 %v1074
    %v1205 = vpop.f32.mrb[0].mxu0
    %v1206 = vadd.f32 0.0, %v1205
    %v1207 = vpop.f32.mrb[0].mxu0
    %v1208 = vadd.f32 0.0, %v1207
    %v1209 = vpop.f32.mrb[0].mxu0
    %v1210 = vadd.f32 0.0, %v1209
    %v1211 = vpop.f32.mrb[0].mxu0
    %v1212 = vadd.f32 0.0, %v1211
    %1213 = vmatprep.mubr.bf16.mxu0 0
    %1214 = vmatmul.mubr.bf16.gmra.mrb[0].mxu0 %v1075
    %v1215 = vpop.f32.mrb[0].mxu0
    %v1216 = vadd.f32 0.0, %v1215
    %v1217 = vpop.f32.mrb[0].mxu0
    %v1218 = vadd.f32 0.0, %v1217
    %v1219 = vpop.f32.mrb[0].mxu0
    %v1220 = vadd.f32 0.0, %v1219
    %v1221 = vpop.f32.mrb[0].mxu0
    %v1222 = vadd.f32 0.0, %v1221
    %1223 = vmatprep.mubr.bf16.mxu0 0
    %1224 = vmatmul.mubr.bf16.gmra.mrb[0].mxu0 %v1076
    %v1225 = vpop.f32.mrb[0].mxu0
    %v1226 = vadd.f32 0.0, %v1225
    %v1227 = vpop.f32.mrb[0].mxu0
    %v1228 = vadd.f32 0.0, %v1227
    %v1229 = vpop.f32.mrb[0].mxu0
    %v1230 = vadd.f32 0.0, %v1229
    %v1231 = vpop.f32.mrb[0].mxu0
    %v1232 = vadd.f32 0.0, %v1231
    %1233 = vmatprep.mubr.bf16.mxu0 0
    %1234 = vmatmul.mubr.bf16.gmra.mrb[0].mxu0 %v1077
    %v1235 = vpop.f32.mrb[0].mxu0
    %v1236 = vadd.f32 0.0, %v1235
    %v1237 = vpop.f32.mrb[0].mxu0
    %v1238 = vadd.f32 0.0, %v1237
    %v1239 = vpop.f32.mrb[0].mxu0
    %v1240 = vadd.f32 0.0, %v1239
    %v1241 = vpop.f32.mrb[0].mxu0
    %v1242 = vadd.f32 0.0, %v1241
    %1243 = vmatprep.mubr.bf16.mxu0 0
    %1244 = vmatmul.mubr.bf16.gmra.mrb[0].mxu0 %v1078
    %v1245 = vpop.f32.mrb[0].mxu0
    %v1246 = vadd.f32 0.0, %v1245
    %v1247 = vpop.f32.mrb[0].mxu0
    %v1248 = vadd.f32 0.0, %v1247
    %v1249 = vpop.f32.mrb[0].mxu0
    %v1250 = vadd.f32 0.0, %v1249
    %v1251 = vpop.f32.mrb[0].mxu0
    %v1252 = vadd.f32 0.0, %v1251
    %1253 = vmatprep.mubr.bf16.mxu0 0
    %1254 = vmatmul.mubr.bf16.gmra.mrb[0].mxu0 %v1079
    %v1255 = vpop.f32.mrb[0].mxu0
    %v1256 = vadd.f32 0.0, %v1255
    %v1257 = vpop.f32.mrb[0].mxu0
    %v1258 = vadd.f32 0.0, %v1257
    %v1259 = vpop.f32.mrb[0].mxu0
    %v1260 = vadd.f32 0.0, %v1259
    %v1261 = vpop.f32.mrb[0].mxu0
    %v1262 = vadd.f32 0.0, %v1261
    %1263 = vmatprep.mubr.bf16.mxu0 0
    %1264 = vmatmul.mubr.bf16.gmra.mrb[0].mxu0 %v1080
    %v1265 = vpop.f32.mrb[0].mxu0
    %v1266 = vadd.f32 0.0, %v1265
    %v1267 = vpop.f32.mrb[0].mxu0
    %v1268 = vadd.f32 0.0, %v1267
    %v1269 = vpop.f32.mrb[0].mxu0
    %v1270 = vadd.f32 0.0, %v1269
    %v1271 = vpop.f32.mrb[0].mxu0
    %v1272 = vadd.f32 0.0, %v1271
    %1273 = vdwg.mxu0
    %v1274 = vpack.c.bf16 %v1120, %v1116
    %v1275 = vpack.c.bf16 %v1122, %v1118
    %v1276 = vpack.c.bf16 %v1130, %v1126
    %v1277 = vpack.c.bf16 %v1132, %v1128
    %v1278 = vpack.c.bf16 %v1140, %v1136
    %v1279 = vpack.c.bf16 %v1142, %v1138
    %v1280 = vpack.c.bf16 %v1150, %v1146
    %v1281 = vpack.c.bf16 %v1152, %v1148
    %v1282 = vpack.c.bf16 %v1160, %v1156
    %v1283 = vpack.c.bf16 %v1162, %v1158
    %v1284 = vpack.c.bf16 %v1170, %v1166
    %v1285 = vpack.c.bf16 %v1172, %v1168
    %v1286 = vpack.c.bf16 %v1180, %v1176
    %v1287 = vpack.c.bf16 %v1182, %v1178
    %v1288 = vpack.c.bf16 %v1190, %v1186
    %v1289 = vpack.c.bf16 %v1192, %v1188
    %v1290 = vpack.c.bf16 %v1200, %v1196
    %v1291 = vpack.c.bf16 %v1202, %v1198
    %v1292 = vpack.c.bf16 %v1210, %v1206
    %v1293 = vpack.c.bf16 %v1212, %v1208
    %v1294 = vpack.c.bf16 %v1220, %v1216
    %v1295 = vpack.c.bf16 %v1222, %v1218
    %v1296 = vpack.c.bf16 %v1230, %v1226
    %v1297 = vpack.c.bf16 %v1232, %v1228
    %v1298 = vpack.c.bf16 %v1240, %v1236
    %v1299 = vpack.c.bf16 %v1242, %v1238
    %v1300 = vpack.c.bf16 %v1250, %v1246
    %v1301 = vpack.c.bf16 %v1252, %v1248
    %v1302 = vpack.c.bf16 %v1260, %v1256
    %v1303 = vpack.c.bf16 %v1262, %v1258
    %v1304 = vpack.c.bf16 %v1270, %v1266
    %v1305 = vpack.c.bf16 %v1272, %v1268
    %v1338 = vunpack.c.l.b16 %v1274
    %v1339 = vunpack.c.l.b16 %v1275
    %v1340 = vunpack.c.h.b16 %v1274
    %v1341 = vunpack.c.h.b16 %v1275
    %v1342 = vunpack.c.l.b16 %v1276
    %v1343 = vunpack.c.l.b16 %v1277
    %v1344 = vunpack.c.h.b16 %v1276
    %v1345 = vunpack.c.h.b16 %v1277
    %v1346 = vunpack.c.l.b16 %v1278
    %v1347 = vunpack.c.l.b16 %v1279
    %v1348 = vunpack.c.h.b16 %v1278
    %v1349 = vunpack.c.h.b16 %v1279
    %v1350 = vunpack.c.l.b16 %v1280
    %v1351 = vunpack.c.l.b16 %v1281
    %v1352 = vunpack.c.h.b16 %v1280
    %v1353 = vunpack.c.h.b16 %v1281
    %v1354 = vunpack.c.l.b16 %v1282
    %v1355 = vunpack.c.l.b16 %v1283
    %v1356 = vunpack.c.h.b16 %v1282
    %v1357 = vunpack.c.h.b16 %v1283
    %v1358 = vunpack.c.l.b16 %v1284
    %v1359 = vunpack.c.l.b16 %v1285
    %v1360 = vunpack.c.h.b16 %v1284
    %v1361 = vunpack.c.h.b16 %v1285
    %v1362 = vunpack.c.l.b16 %v1286
    %v1363 = vunpack.c.l.b16 %v1287
    %v1364 = vunpack.c.h.b16 %v1286
    %v1365 = vunpack.c.h.b16 %v1287
    %v1366 = vunpack.c.l.b16 %v1288
    %v1367 = vunpack.c.l.b16 %v1289
    %v1368 = vunpack.c.h.b16 %v1288
    %v1369 = vunpack.c.h.b16 %v1289
    %v1370 = vunpack.c.l.b16 %v1290
    %v1371 = vunpack.c.l.b16 %v1291
    %v1372 = vunpack.c.h.b16 %v1290
    %v1373 = vunpack.c.h.b16 %v1291
    %v1374 = vunpack.c.l.b16 %v1292
    %v1375 = vunpack.c.l.b16 %v1293
    %v1376 = vunpack.c.h.b16 %v1292
    %v1377 = vunpack.c.h.b16 %v1293
    %v1378 = vunpack.c.l.b16 %v1294
    %v1379 = vunpack.c.l.b16 %v1295
    %v1380 = vunpack.c.h.b16 %v1294
    %v1381 = vunpack.c.h.b16 %v1295
    %v1382 = vunpack.c.l.b16 %v1296
    %v1383 = vunpack.c.l.b16 %v1297
    %v1384 = vunpack.c.h.b16 %v1296
    %v1385 = vunpack.c.h.b16 %v1297
    %v1386 = vunpack.c.l.b16 %v1298
    %v1387 = vunpack.c.l.b16 %v1299
    %v1388 = vunpack.c.h.b16 %v1298
    %v1389 = vunpack.c.h.b16 %v1299
    %v1390 = vunpack.c.l.b16 %v1300
    %v1391 = vunpack.c.l.b16 %v1301
    %v1392 = vunpack.c.h.b16 %v1300
    %v1393 = vunpack.c.h.b16 %v1301
    %v1394 = vunpack.c.l.b16 %v1302
    %v1395 = vunpack.c.l.b16 %v1303
    %v1396 = vunpack.c.h.b16 %v1302
    %v1397 = vunpack.c.h.b16 %v1303
    %v1398 = vunpack.c.l.b16 %v1304
    %v1399 = vunpack.c.l.b16 %v1305
    %v1400 = vunpack.c.h.b16 %v1304
    %v1401 = vunpack.c.h.b16 %v1305
    %v1402 = vpack.c.b16 %v1339, %v1338
    %v1403 = vpack.c.b16 %v1341, %v1340
    %v1404 = vpack.c.b16 %v1343, %v1342
    %v1405 = vpack.c.b16 %v1345, %v1344
    %v1406 = vpack.c.b16 %v1347, %v1346
    %v1407 = vpack.c.b16 %v1349, %v1348
    %v1408 = vpack.c.b16 %v1351, %v1350
    %v1409 = vpack.c.b16 %v1353, %v1352
    %v1410 = vpack.c.b16 %v1355, %v1354
    %v1411 = vpack.c.b16 %v1357, %v1356
    %v1412 = vpack.c.b16 %v1359, %v1358
    %v1413 = vpack.c.b16 %v1361, %v1360
    %v1414 = vpack.c.b16 %v1363, %v1362
    %v1415 = vpack.c.b16 %v1365, %v1364
    %v1416 = vpack.c.b16 %v1367, %v1366
    %v1417 = vpack.c.b16 %v1369, %v1368
    %v1418 = vpack.c.b16 %v1371, %v1370
    %v1419 = vpack.c.b16 %v1373, %v1372
    %v1420 = vpack.c.b16 %v1375, %v1374
    %v1421 = vpack.c.b16 %v1377, %v1376
    %v1422 = vpack.c.b16 %v1379, %v1378
    %v1423 = vpack.c.b16 %v1381, %v1380
    %v1424 = vpack.c.b16 %v1383, %v1382
    %v1425 = vpack.c.b16 %v1385, %v1384
    %v1426 = vpack.c.b16 %v1387, %v1386
    %v1427 = vpack.c.b16 %v1389, %v1388
    %v1428 = vpack.c.b16 %v1391, %v1390
    %v1429 = vpack.c.b16 %v1393, %v1392
    %v1430 = vpack.c.b16 %v1395, %v1394
    %v1431 = vpack.c.b16 %v1397, %v1396
    %v1432 = vpack.c.b16 %v1399, %v1398
    %v1433 = vpack.c.b16 %v1401, %v1400
    %1466 = vst [vmem:[#allocation5] sm:$0xff] %v1402
    %1467 = vst [vmem:[#allocation5 + $0x8] sm:$0xff] %v1403
    %1468 = vst [vmem:[#allocation5 + $0x10] sm:$0xff] %v1404
    %1469 = vst [vmem:[#allocation5 + $0x18] sm:$0xff] %v1405
    %1470 = vst [vmem:[#allocation5 + $0x20] sm:$0xff] %v1406
    %1471 = vst [vmem:[#allocation5 + $0x28] sm:$0xff] %v1407
    %1472 = vst [vmem:[#allocation5 + $0x30] sm:$0xff] %v1408
    %1473 = vst [vmem:[#allocation5 + $0x38] sm:$0xff] %v1409
    %1474 = vst [vmem:[#allocation5 + $0x40] sm:$0xff] %v1410
    %1475 = vst [vmem:[#allocation5 + $0x48] sm:$0xff] %v1411
    %1476 = vst [vmem:[#allocation5 + $0x50] sm:$0xff] %v1412
    %1477 = vst [vmem:[#allocation5 + $0x58] sm:$0xff] %v1413
    %1478 = vst [vmem:[#allocation5 + $0x60] sm:$0xff] %v1414
    %1479 = vst [vmem:[#allocation5 + $0x68] sm:$0xff] %v1415
    %1480 = vst [vmem:[#allocation5 + $0x70] sm:$0xff] %v1416
    %1481 = vst [vmem:[#allocation5 + $0x78] sm:$0xff] %v1417
    %1482 = vst [vmem:[#allocation5 + $0x80] sm:$0xff] %v1418
    %1483 = vst [vmem:[#allocation5 + $0x88] sm:$0xff] %v1419
    %1484 = vst [vmem:[#allocation5 + $0x90] sm:$0xff] %v1420
    %1485 = vst [vmem:[#allocation5 + $0x98] sm:$0xff] %v1421
    %1486 = vst [vmem:[#allocation5 + $0xa0] sm:$0xff] %v1422
    %1487 = vst [vmem:[#allocation5 + $0xa8] sm:$0xff] %v1423
    %1488 = vst [vmem:[#allocation5 + $0xb0] sm:$0xff] %v1424
    %1489 = vst [vmem:[#allocation5 + $0xb8] sm:$0xff] %v1425
    %1490 = vst [vmem:[#allocation5 + $0xc0] sm:$0xff] %v1426
    %1491 = vst [vmem:[#allocation5 + $0xc8] sm:$0xff] %v1427
    %1492 = vst [vmem:[#allocation5 + $0xd0] sm:$0xff] %v1428
    %1493 = vst [vmem:[#allocation5 + $0xd8] sm:$0xff] %v1429
    %1494 = vst [vmem:[#allocation5 + $0xe0] sm:$0xff] %v1430
    %1495 = vst [vmem:[#allocation5 + $0xe8] sm:$0xff] %v1431
    %1496 = vst [vmem:[#allocation5 + $0xf0] sm:$0xff] %v1432
    %1497 = vst [vmem:[#allocation5 + $0xf8] sm:$0xff] %v1433
    // Predicated region
    $region22: #{tpu_custom_call.1} parent=1 // pred_check
      _
    $region23: #{tpu_custom_call.1} parent=1 // pred_check_branch
      %1499 = sbr.rel (0) target = $region25
    $region24: #{tpu_custom_call.1} parent=1 // pred_region
      %s1501 = ssub.s32 4096, 4096
      %1502 = vsyncadd [#allocation4], %s1501
      %s1503 = sshll.u32 [#allocation5], 4
      %s1504 = int_to_ptr.vmem [resolvable:$true] %s1503
      %1509 = dma.vmem_to_hbm [thread:$0]  %s1504, 4096, %s4, [#allocation4], 128, 128, 8
    $region25: #{tpu_custom_call.1} parent=1 // pred_fallthru
      _
    // Predicated region
    $region26: #{tpu_custom_call.1} parent=1 // pred_check
      _
    $region27: #{tpu_custom_call.1} parent=1 // pred_check_branch
      %1511 = sbr.rel (0) target = $region29
    $region28: #{tpu_custom_call.1} parent=1 // pred_region
      _
    $region29: #{tpu_custom_call.1} parent=1 // pred_fallthru
      _
    // Predicated region
    $region30: #{tpu_custom_call.1} parent=1 // pred_check
      _
    $region31: #{tpu_custom_call.1} parent=1 // pred_check_branch
      %1513 = sbr.rel (0) target = $region33
    $region32: #{tpu_custom_call.1} parent=1 // pred_region
      %1514 = dma.done [#allocation4], 4096
    $region33: #{tpu_custom_call.1} parent=1 // pred_fallthru
      _
    // Predicated region
    $region34: #{tpu_custom_call.1} parent=1 // pred_check
      _
    $region35: #{tpu_custom_call.1} parent=1 // pred_check_branch
      %1516 = sbr.rel (0) target = $region37
    $region36: #{tpu_custom_call.1} parent=1 // pred_region
      _
    $region37: #{tpu_custom_call.1} parent=1 // pred_fallthru
      _
    %1517 = vsyncpa [#allocation3], 1
    %1518 = vsyncpa [#allocation4], 1

</llo_original>
